<compile_context>
chip_gen: v5e
topology: v5e:2x2
jax: 0.10.0
libtpu: 0.0.40
codegen_flags: <defaults>
</compile_context>

<pallas_src>
import jax
import jax.numpy as jnp
from jax.experimental import pallas as pl
from jax.experimental.pallas import tpu as pltpu


# ----------------------------------------------------------------------------
# Fused kernel: bidirectional LSTM recurrence + mask + MLP, one invocation.
# ----------------------------------------------------------------------------
def _make_fused_kernel(T, B, H):
    H2, H6, H8 = 2 * H, 6 * H, 8 * H

    def kernel(x_ref, m_ref, wih_ref, whh_ref, bg_ref,
               w1_ref, b1_ref, g1_ref, be1_ref,
               w2_ref, b2_ref, g2_ref, be2_ref,
               w3_ref, b3_ref, out_ref, xp_sc, h_sc):
        # ---- hoisted input projection: all timesteps, both directions --------
        xp_sc[...] = (jnp.dot(x_ref[...], wih_ref[...],
                              preferred_element_type=jnp.float32)
                      + bg_ref[...])                        # (T*B, 8H)
        whh = whh_ref[...]                                  # (2H, 8H) block-diag

        h_cat = jnp.zeros((B, H2), jnp.float32)             # [h_f | h_b]
        c_cat = jnp.zeros((B, H2), jnp.float32)             # [c_f | c_b]

        # ---- fully-unrolled bidirectional recurrence (static T) --------------
        for t in range(T):
            gates = xp_sc[t * B:(t + 1) * B, :] + jnp.dot(
                h_cat, whh, preferred_element_type=jnp.float32)   # (B, 8H)
            sg = jax.nn.sigmoid(gates[:, 0:H6])   # [i_f,i_b,f_f,f_b,o_f,o_b]
            tg = jnp.tanh(gates[:, H6:H8])        # [g_f, g_b]
            i_cat = sg[:, 0:H2]
            f_cat = sg[:, H2:2 * H2]
            o_cat = sg[:, 2 * H2:3 * H2]
            c_cat = f_cat * c_cat + i_cat * tg
            h_cat = o_cat * jnp.tanh(c_cat)
            # forward half -> time t ; backward half -> time T-1-t
            h_sc[t * B:(t + 1) * B, 0:H] = h_cat[:, 0:H]
            h_sc[(T - 1 - t) * B:(T - t) * B, H:H2] = h_cat[:, H:H2]

        # ---- mask + MLP (Linear/ReLU/LayerNorm x2 + Linear), all in VMEM ------
        hid = h_sc[...] * m_ref[...]                        # (T*B, 2H) * (T*B, 1)

        def layernorm(y, g, b):
            mu = jnp.mean(y, axis=-1, keepdims=True)
            var = jnp.mean((y - mu) ** 2, axis=-1, keepdims=True)
            return (y - mu) * jax.lax.rsqrt(var + 1e-5) * g + b

        h1 = jnp.dot(hid, w1_ref[...], preferred_element_type=jnp.float32) + b1_ref[...]
        h1 = layernorm(jnp.maximum(h1, 0.0), g1_ref[...], be1_ref[...])
        h2 = jnp.dot(h1, w2_ref[...], preferred_element_type=jnp.float32) + b2_ref[...]
        h2 = layernorm(jnp.maximum(h2, 0.0), g2_ref[...], be2_ref[...])
        out = jnp.dot(h2, w3_ref[...], preferred_element_type=jnp.float32) + b3_ref[...]
        out_ref[...] = out.astype(out_ref.dtype)

    return kernel


def _interleave_gate_cols(wf, wb):
    """Per-direction canonical gate order is [i, f, g, o] (PyTorch).
    Returns columns interleaved as [i_f,i_b,f_f,f_b,o_f,o_b,g_f,g_b]."""
    i_f, f_f, g_f, o_f = jnp.split(wf, 4, axis=1)
    i_b, f_b, g_b, o_b = jnp.split(wb, 4, axis=1)
    return jnp.concatenate([i_f, i_b, f_f, f_b, o_f, o_b, g_f, g_b], axis=1)


# ----------------------------------------------------------------------------
# Full forward (matches ClanLSTMbatch_onehot.forward)
# ----------------------------------------------------------------------------
@jax.jit
def clan_lstm_batch_forward(params, x, mask):
    B, T, I = x.shape
    H = params["whh_f"].shape[0]
    out_dim = params["w3"].shape[1]
    out_pad = ((out_dim + 127) // 128) * 128

    # Fused LSTM weights: block-diagonal over [x_t | x_{T-1-t}] and [h_f | h_b].
    z_i = jnp.zeros_like(params["wih_f"])
    z_h = jnp.zeros_like(params["whh_f"])
    wih = jnp.concatenate([_interleave_gate_cols(params["wih_f"], z_i),
                           _interleave_gate_cols(z_i, params["wih_b"])], axis=0)
    whh = jnp.concatenate([_interleave_gate_cols(params["whh_f"], z_h),
                           _interleave_gate_cols(z_h, params["whh_b"])], axis=0)
    bg = _interleave_gate_cols(params["b_f"], params["b_b"])

    # Lane-dense final projection: pad output width to a multiple of 128.
    w3 = jnp.zeros((params["w3"].shape[0], out_pad),
                   jnp.float32).at[:, :out_dim].set(params["w3"])
    b3 = jnp.zeros((1, out_pad), jnp.float32).at[:, :out_dim].set(params["b3"])

    # Time-major flattening; row block t carries [x_t | x_{T-1-t}].
    x_tbe = jnp.transpose(x, (1, 0, 2)).astype(jnp.float32)          # (T, B, I)
    x_big = jnp.concatenate([x_tbe, x_tbe[::-1]], axis=-1).reshape(T * B, 2 * I)
    m_flat = jnp.transpose(mask, (1, 0)).reshape(T * B, 1).astype(jnp.float32)

    out = pl.pallas_call(
        _make_fused_kernel(T, B, H),
        out_shape=jax.ShapeDtypeStruct((T * B, out_pad), jnp.float32),
        scratch_shapes=[
            pltpu.VMEM((T * B, 8 * H), jnp.float32),   # hoisted x-projection
            pltpu.VMEM((T * B, 2 * H), jnp.float32),   # bidirectional hidden states
        ],
    )(x_big, m_flat, wih, whh, bg,
      params["w1"], params["b1"], params["g1"], params["be1"],
      params["w2"], params["b2"], params["g2"], params["be2"],
      w3, b3)

    return jnp.transpose(out[:, :out_dim].reshape(T, B, out_dim), (1, 0, 2))


# ----------------------------------------------------------------------------
# Deterministic parameter init (shapes implied by nn.LSTM / Linear / LayerNorm)
# ----------------------------------------------------------------------------
def init_params(key, embed_dim, output_dim, input_dim=33):
    E, H, I = embed_dim, embed_dim, input_dim
    keys = jax.random.split(key, 12)
    s = 0.1

    def rnd(k, shape):
        return (s * jax.random.normal(k, shape)).astype(jnp.float32)

    return {
        # LSTM forward direction (weights stored transposed: (in, 4H), [i,f,g,o])
        "wih_f": rnd(keys[0], (I, 4 * H)),
        "whh_f": rnd(keys[1], (H, 4 * H)),
        "b_f":   rnd(keys[2], (1, 4 * H)),   # bias_ih + bias_hh combined
        # LSTM reverse direction
        "wih_b": rnd(keys[3], (I, 4 * H)),
        "whh_b": rnd(keys[4], (H, 4 * H)),
        "b_b":   rnd(keys[5], (1, 4 * H)),
        # Linear(2E -> 4E), LayerNorm(4E)
        "w1":  rnd(keys[6], (2 * E, 4 * E)),
        "b1":  rnd(keys[7], (1, 4 * E)),
        "g1":  jnp.ones((1, 4 * E), jnp.float32),
        "be1": jnp.zeros((1, 4 * E), jnp.float32),
        # Linear(4E -> 4E), LayerNorm(4E)
        "w2":  rnd(keys[8], (4 * E, 4 * E)),
        "b2":  rnd(keys[9], (1, 4 * E)),
        "g2":  jnp.ones((1, 4 * E), jnp.float32),
        "be2": jnp.zeros((1, 4 * E), jnp.float32),
        # Linear(4E -> output_dim)
        "w3":  rnd(keys[10], (4 * E, output_dim)),
        "b3":  rnd(keys[11], (1, output_dim)),
    }


# ----------------------------------------------------------------------------
# Pure-JAX reference (sanity check)
# ----------------------------------------------------------------------------
def _ref_lstm_dir(x_tbe, w_ih, w_hh, b, reverse):
    T, B, _ = x_tbe.shape
    H = w_hh.shape[0]
    xs = x_tbe[::-1] if reverse else x_tbe
    hi = jax.lax.Precision.HIGHEST

    def step(carry, x_t):
        h, c = carry
        gates = (jnp.dot(x_t, w_ih, precision=hi)
                 + jnp.dot(h, w_hh, precision=hi) + b)
        i = jax.nn.sigmoid(gates[:, :H])
        f = jax.nn.sigmoid(gates[:, H:2 * H])
        g = jnp.tanh(gates[:, 2 * H:3 * H])
        o = jax.nn.sigmoid(gates[:, 3 * H:])
        c = f * c + i * g
        h = o * jnp.tanh(c)
        return (h, c), h

    init = (jnp.zeros((B, H), jnp.float32), jnp.zeros((B, H), jnp.float32))
    _, hs = jax.lax.scan(step, init, xs)
    return hs[::-1] if reverse else hs


def reference_forward(params, x, mask):
    hi = jax.lax.Precision.HIGHEST
    x_tbe = jnp.transpose(x, (1, 0, 2))
    h_f = _ref_lstm_dir(x_tbe, params["wih_f"], params["whh_f"], params["b_f"], False)
    h_b = _ref_lstm_dir(x_tbe, params["wih_b"], params["whh_b"], params["b_b"], True)
    h = jnp.concatenate([h_f, h_b], axis=-1)
    h = jnp.transpose(h, (1, 0, 2))                        # (B, T, 2E)
    h = h * mask[..., None].astype(jnp.float32)

    def ln(y, g, b):
        mu = jnp.mean(y, axis=-1, keepdims=True)
        var = jnp.mean((y - mu) ** 2, axis=-1, keepdims=True)
        return (y - mu) * jax.lax.rsqrt(var + 1e-5) * g + b

    y = jnp.maximum(jnp.dot(h, params["w1"], precision=hi) + params["b1"], 0.0)
    y = ln(y, params["g1"], params["be1"])
    y = jnp.maximum(jnp.dot(y, params["w2"], precision=hi) + params["b2"], 0.0)
    y = ln(y, params["g2"], params["be2"])
    y = jnp.dot(y, params["w3"], precision=hi) + params["b3"]
    return y


if __name__ == "__main__":
    B, T, E, I, OUT = 2, 8, 32, 33, 16

    key = jax.random.PRNGKey(0)
    k_param, k_x, k_m = jax.random.split(key, 3)

    params = init_params(k_param, embed_dim=E, output_dim=OUT, input_dim=I)
    x = jax.random.normal(k_x, (B, T, I), dtype=jnp.float32)
    mask = (jax.random.uniform(k_m, (B, T)) > 0.3).astype(jnp.float32)

    out = clan_lstm_batch_forward(params, x, mask)
    out = jax.block_until_ready(out)

    ref = reference_forward(params, x, mask)
    assert out.shape == (B, T, OUT)
    max_err = float(jnp.max(jnp.abs(out - ref)))
    assert jnp.allclose(out, ref, atol=3e-3, rtol=3e-3), max_err

    print("KERNEL_OK")
</pallas_src>

<mosaic_0001>
module attributes {stable_mosaic.version = 11 : i64} {
  func.func @kernel(%arg0: memref<16x66xf32, #tpu.memory_space<vmem>>, %arg1: memref<16x1xf32, #tpu.memory_space<vmem>>, %arg2: memref<66x256xf32, #tpu.memory_space<vmem>>, %arg3: memref<64x256xf32, #tpu.memory_space<vmem>>, %arg4: memref<1x256xf32, #tpu.memory_space<vmem>>, %arg5: memref<64x128xf32, #tpu.memory_space<vmem>>, %arg6: memref<1x128xf32, #tpu.memory_space<vmem>>, %arg7: memref<1x128xf32, #tpu.memory_space<vmem>>, %arg8: memref<1x128xf32, #tpu.memory_space<vmem>>, %arg9: memref<128x128xf32, #tpu.memory_space<vmem>>, %arg10: memref<1x128xf32, #tpu.memory_space<vmem>>, %arg11: memref<1x128xf32, #tpu.memory_space<vmem>>, %arg12: memref<1x128xf32, #tpu.memory_space<vmem>>, %arg13: memref<128x128xf32, #tpu.memory_space<vmem>>, %arg14: memref<1x128xf32, #tpu.memory_space<vmem>>, %arg15: memref<16x128xf32, #tpu.memory_space<vmem>>, %arg16: memref<16x256xf32, #tpu.memory_space<vmem>>, %arg17: memref<16x64xf32, #tpu.memory_space<vmem>>) attributes {dimension_semantics = [], scalar_prefetch = 0 : i64, scratch_operands = 2 : i64, tpu.core_type = #tpu.core_type<tc>} {
    %c0 = arith.constant 0 : index
    %c0_0 = arith.constant 0 : index
    %0 = vector.load %arg0[%c0, %c0_0] : memref<16x66xf32, #tpu.memory_space<vmem>>, vector<16x66xf32>
    %c0_1 = arith.constant 0 : index
    %c0_2 = arith.constant 0 : index
    %1 = vector.load %arg2[%c0_1, %c0_2] : memref<66x256xf32, #tpu.memory_space<vmem>>, vector<66x256xf32>
    %cst = arith.constant dense<0.000000e+00> : vector<16x256xf32>
    %2 = tpu.matmul %0, %1, %cst {dimension_numbers = #tpu.dot_dimension_numbers<[1], [0], [0], [1], [0, 0, 1, 1], [], []>} : vector<16x66xf32>, vector<66x256xf32>, vector<16x256xf32> -> vector<16x256xf32>
    %c0_3 = arith.constant 0 : index
    %c0_4 = arith.constant 0 : index
    %3 = vector.load %arg4[%c0_3, %c0_4] : memref<1x256xf32, #tpu.memory_space<vmem>>, vector<1x256xf32>
    %4 = vector.broadcast %3 : vector<1x256xf32> to vector<16x256xf32>
    %5 = arith.addf %2, %4 : vector<16x256xf32>
    %c0_5 = arith.constant 0 : index
    %c0_6 = arith.constant 0 : index
    %6 = vector.load %arg16[%c0_5, %c0_6] : memref<16x256xf32, #tpu.memory_space<vmem>>, vector<16x256xf32>
    tpu.vector_store %arg16[%c0_5, %c0_6], %5 {strides = array<i32>} : memref<16x256xf32, #tpu.memory_space<vmem>>, vector<16x256xf32>,
    %c0_7 = arith.constant 0 : index
    %c0_8 = arith.constant 0 : index
    %7 = vector.load %arg3[%c0_7, %c0_8] : memref<64x256xf32, #tpu.memory_space<vmem>>, vector<64x256xf32>
    %cst_9 = arith.constant 0.000000e+00 : f32
    %8 = vector.broadcast %cst_9 : f32 to vector<2x64xf32>
    %cst_10 = arith.constant 0.000000e+00 : f32
    %9 = vector.broadcast %cst_10 : f32 to vector<2x64xf32>
    %c0_11 = arith.constant 0 : index
    %c0_12 = arith.constant 0 : index
    %10 = vector.load %arg16[%c0_11, %c0_12] : memref<16x256xf32, #tpu.memory_space<vmem>>, vector<2x256xf32>
    %cst_13 = arith.constant dense<0.000000e+00> : vector<2x256xf32>
    %11 = tpu.matmul %8, %7, %cst_13 {dimension_numbers = #tpu.dot_dimension_numbers<[1], [0], [0], [1], [0, 0, 1, 1], [], []>} : vector<2x64xf32>, vector<64x256xf32>, vector<2x256xf32> -> vector<2x256xf32>
    %12 = arith.addf %10, %11 : vector<2x256xf32>
    %13 = vector.extract_strided_slice %12 {offsets = [0, 0], sizes = [2, 192], strides = [1, 1]} : vector<2x256xf32> to vector<2x192xf32>
    %14 = arith.negf %13 : vector<2x192xf32>
    %15 = math.exp %14 : vector<2x192xf32>
    %cst_14 = arith.constant 1.000000e+00 : f32
    %16 = vector.broadcast %cst_14 : f32 to vector<2x192xf32>
    %17 = arith.addf %16, %15 : vector<2x192xf32>
    %18 = arith.divf %16, %17 : vector<2x192xf32>
    %19 = vector.extract_strided_slice %12 {offsets = [0, 192], sizes = [2, 64], strides = [1, 1]} : vector<2x256xf32> to vector<2x64xf32>
    %20 = math.tanh %19 : vector<2x64xf32>
    %21 = vector.extract_strided_slice %18 {offsets = [0, 0], sizes = [2, 64], strides = [1, 1]} : vector<2x192xf32> to vector<2x64xf32>
    %22 = vector.extract_strided_slice %18 {offsets = [0, 64], sizes = [2, 64], strides = [1, 1]} : vector<2x192xf32> to vector<2x64xf32>
    %23 = vector.extract_strided_slice %18 {offsets = [0, 128], sizes = [2, 64], strides = [1, 1]} : vector<2x192xf32> to vector<2x64xf32>
    %24 = arith.mulf %22, %9 : vector<2x64xf32>
    %25 = arith.mulf %21, %20 : vector<2x64xf32>
    %26 = arith.addf %24, %25 : vector<2x64xf32>
    %27 = math.tanh %26 : vector<2x64xf32>
    %28 = arith.mulf %23, %27 : vector<2x64xf32>
    %29 = vector.extract_strided_slice %28 {offsets = [0, 0], sizes = [2, 32], strides = [1, 1]} : vector<2x64xf32> to vector<2x32xf32>
    %c0_15 = arith.constant 0 : index
    %c0_16 = arith.constant 0 : index
    %30 = vector.load %arg17[%c0_15, %c0_16] : memref<16x64xf32, #tpu.memory_space<vmem>>, vector<2x32xf32>
    tpu.vector_store %arg17[%c0_15, %c0_16], %29 {strides = array<i32>} : memref<16x64xf32, #tpu.memory_space<vmem>>, vector<2x32xf32>,
    %31 = vector.extract_strided_slice %28 {offsets = [0, 32], sizes = [2, 32], strides = [1, 1]} : vector<2x64xf32> to vector<2x32xf32>
    %c14 = arith.constant 14 : index
    %c32 = arith.constant 32 : index
    %32 = vector.load %arg17[%c14, %c32] : memref<16x64xf32, #tpu.memory_space<vmem>>, vector<2x32xf32>
    tpu.vector_store %arg17[%c14, %c32], %31 {strides = array<i32>} : memref<16x64xf32, #tpu.memory_space<vmem>>, vector<2x32xf32>,
    %c2 = arith.constant 2 : index
    %c0_17 = arith.constant 0 : index
    %33 = vector.load %arg16[%c2, %c0_17] : memref<16x256xf32, #tpu.memory_space<vmem>>, vector<2x256xf32>
    %cst_18 = arith.constant dense<0.000000e+00> : vector<2x256xf32>
    %34 = tpu.matmul %28, %7, %cst_18 {dimension_numbers = #tpu.dot_dimension_numbers<[1], [0], [0], [1], [0, 0, 1, 1], [], []>} : vector<2x64xf32>, vector<64x256xf32>, vector<2x256xf32> -> vector<2x256xf32>
    %35 = arith.addf %33, %34 : vector<2x256xf32>
    %36 = vector.extract_strided_slice %35 {offsets = [0, 0], sizes = [2, 192], strides = [1, 1]} : vector<2x256xf32> to vector<2x192xf32>
    %37 = arith.negf %36 : vector<2x192xf32>
    %38 = math.exp %37 : vector<2x192xf32>
    %cst_19 = arith.constant 1.000000e+00 : f32
    %39 = vector.broadcast %cst_19 : f32 to vector<2x192xf32>
    %40 = arith.addf %39, %38 : vector<2x192xf32>
    %41 = arith.divf %39, %40 : vector<2x192xf32>
    %42 = vector.extract_strided_slice %35 {offsets = [0, 192], sizes = [2, 64], strides = [1, 1]} : vector<2x256xf32> to vector<2x64xf32>
    %43 = math.tanh %42 : vector<2x64xf32>
    %44 = vector.extract_strided_slice %41 {offsets = [0, 0], sizes = [2, 64], strides = [1, 1]} : vector<2x192xf32> to vector<2x64xf32>
    %45 = vector.extract_strided_slice %41 {offsets = [0, 64], sizes = [2, 64], strides = [1, 1]} : vector<2x192xf32> to vector<2x64xf32>
    %46 = vector.extract_strided_slice %41 {offsets = [0, 128], sizes = [2, 64], strides = [1, 1]} : vector<2x192xf32> to vector<2x64xf32>
    %47 = arith.mulf %45, %26 : vector<2x64xf32>
    %48 = arith.mulf %44, %43 : vector<2x64xf32>
    %49 = arith.addf %47, %48 : vector<2x64xf32>
    %50 = math.tanh %49 : vector<2x64xf32>
    %51 = arith.mulf %46, %50 : vector<2x64xf32>
    %52 = vector.extract_strided_slice %51 {offsets = [0, 0], sizes = [2, 32], strides = [1, 1]} : vector<2x64xf32> to vector<2x32xf32>
    %c2_20 = arith.constant 2 : index
    %c0_21 = arith.constant 0 : index
    %53 = vector.load %arg17[%c2_20, %c0_21] : memref<16x64xf32, #tpu.memory_space<vmem>>, vector<2x32xf32>
    tpu.vector_store %arg17[%c2_20, %c0_21], %52 {strides = array<i32>} : memref<16x64xf32, #tpu.memory_space<vmem>>, vector<2x32xf32>,
    %54 = vector.extract_strided_slice %51 {offsets = [0, 32], sizes = [2, 32], strides = [1, 1]} : vector<2x64xf32> to vector<2x32xf32>
    %c12 = arith.constant 12 : index
    %c32_22 = arith.constant 32 : index
    %55 = vector.load %arg17[%c12, %c32_22] : memref<16x64xf32, #tpu.memory_space<vmem>>, vector<2x32xf32>
    tpu.vector_store %arg17[%c12, %c32_22], %54 {strides = array<i32>} : memref<16x64xf32, #tpu.memory_space<vmem>>, vector<2x32xf32>,
    %c4 = arith.constant 4 : index
    %c0_23 = arith.constant 0 : index
    %56 = vector.load %arg16[%c4, %c0_23] : memref<16x256xf32, #tpu.memory_space<vmem>>, vector<2x256xf32>
    %cst_24 = arith.constant dense<0.000000e+00> : vector<2x256xf32>
    %57 = tpu.matmul %51, %7, %cst_24 {dimension_numbers = #tpu.dot_dimension_numbers<[1], [0], [0], [1], [0, 0, 1, 1], [], []>} : vector<2x64xf32>, vector<64x256xf32>, vector<2x256xf32> -> vector<2x256xf32>
    %58 = arith.addf %56, %57 : vector<2x256xf32>
    %59 = vector.extract_strided_slice %58 {offsets = [0, 0], sizes = [2, 192], strides = [1, 1]} : vector<2x256xf32> to vector<2x192xf32>
    %60 = arith.negf %59 : vector<2x192xf32>
    %61 = math.exp %60 : vector<2x192xf32>
    %cst_25 = arith.constant 1.000000e+00 : f32
    %62 = vector.broadcast %cst_25 : f32 to vector<2x192xf32>
    %63 = arith.addf %62, %61 : vector<2x192xf32>
    %64 = arith.divf %62, %63 : vector<2x192xf32>
    %65 = vector.extract_strided_slice %58 {offsets = [0, 192], sizes = [2, 64], strides = [1, 1]} : vector<2x256xf32> to vector<2x64xf32>
    %66 = math.tanh %65 : vector<2x64xf32>
    %67 = vector.extract_strided_slice %64 {offsets = [0, 0], sizes = [2, 64], strides = [1, 1]} : vector<2x192xf32> to vector<2x64xf32>
    %68 = vector.extract_strided_slice %64 {offsets = [0, 64], sizes = [2, 64], strides = [1, 1]} : vector<2x192xf32> to vector<2x64xf32>
    %69 = vector.extract_strided_slice %64 {offsets = [0, 128], sizes = [2, 64], strides = [1, 1]} : vector<2x192xf32> to vector<2x64xf32>
    %70 = arith.mulf %68, %49 : vector<2x64xf32>
    %71 = arith.mulf %67, %66 : vector<2x64xf32>
    %72 = arith.addf %70, %71 : vector<2x64xf32>
    %73 = math.tanh %72 : vector<2x64xf32>
    %74 = arith.mulf %69, %73 : vector<2x64xf32>
    %75 = vector.extract_strided_slice %74 {offsets = [0, 0], sizes = [2, 32], strides = [1, 1]} : vector<2x64xf32> to vector<2x32xf32>
    %c4_26 = arith.constant 4 : index
    %c0_27 = arith.constant 0 : index
    %76 = vector.load %arg17[%c4_26, %c0_27] : memref<16x64xf32, #tpu.memory_space<vmem>>, vector<2x32xf32>
    tpu.vector_store %arg17[%c4_26, %c0_27], %75 {strides = array<i32>} : memref<16x64xf32, #tpu.memory_space<vmem>>, vector<2x32xf32>,
    %77 = vector.extract_strided_slice %74 {offsets = [0, 32], sizes = [2, 32], strides = [1, 1]} : vector<2x64xf32> to vector<2x32xf32>
    %c10 = arith.constant 10 : index
    %c32_28 = arith.constant 32 : index
    %78 = vector.load %arg17[%c10, %c32_28] : memref<16x64xf32, #tpu.memory_space<vmem>>, vector<2x32xf32>
    tpu.vector_store %arg17[%c10, %c32_28], %77 {strides = array<i32>} : memref<16x64xf32, #tpu.memory_space<vmem>>, vector<2x32xf32>,
    %c6 = arith.constant 6 : index
    %c0_29 = arith.constant 0 : index
    %79 = vector.load %arg16[%c6, %c0_29] : memref<16x256xf32, #tpu.memory_space<vmem>>, vector<2x256xf32>
    %cst_30 = arith.constant dense<0.000000e+00> : vector<2x256xf32>
    %80 = tpu.matmul %74, %7, %cst_30 {dimension_numbers = #tpu.dot_dimension_numbers<[1], [0], [0], [1], [0, 0, 1, 1], [], []>} : vector<2x64xf32>, vector<64x256xf32>, vector<2x256xf32> -> vector<2x256xf32>
    %81 = arith.addf %79, %80 : vector<2x256xf32>
    %82 = vector.extract_strided_slice %81 {offsets = [0, 0], sizes = [2, 192], strides = [1, 1]} : vector<2x256xf32> to vector<2x192xf32>
    %83 = arith.negf %82 : vector<2x192xf32>
    %84 = math.exp %83 : vector<2x192xf32>
    %cst_31 = arith.constant 1.000000e+00 : f32
    %85 = vector.broadcast %cst_31 : f32 to vector<2x192xf32>
    %86 = arith.addf %85, %84 : vector<2x192xf32>
    %87 = arith.divf %85, %86 : vector<2x192xf32>
    %88 = vector.extract_strided_slice %81 {offsets = [0, 192], sizes = [2, 64], strides = [1, 1]} : vector<2x256xf32> to vector<2x64xf32>
    %89 = math.tanh %88 : vector<2x64xf32>
    %90 = vector.extract_strided_slice %87 {offsets = [0, 0], sizes = [2, 64], strides = [1, 1]} : vector<2x192xf32> to vector<2x64xf32>
    %91 = vector.extract_strided_slice %87 {offsets = [0, 64], sizes = [2, 64], strides = [1, 1]} : vector<2x192xf32> to vector<2x64xf32>
    %92 = vector.extract_strided_slice %87 {offsets = [0, 128], sizes = [2, 64], strides = [1, 1]} : vector<2x192xf32> to vector<2x64xf32>
    %93 = arith.mulf %91, %72 : vector<2x64xf32>
    %94 = arith.mulf %90, %89 : vector<2x64xf32>
    %95 = arith.addf %93, %94 : vector<2x64xf32>
    %96 = math.tanh %95 : vector<2x64xf32>
    %97 = arith.mulf %92, %96 : vector<2x64xf32>
    %98 = vector.extract_strided_slice %97 {offsets = [0, 0], sizes = [2, 32], strides = [1, 1]} : vector<2x64xf32> to vector<2x32xf32>
    %c6_32 = arith.constant 6 : index
    %c0_33 = arith.constant 0 : index
    %99 = vector.load %arg17[%c6_32, %c0_33] : memref<16x64xf32, #tpu.memory_space<vmem>>, vector<2x32xf32>
    tpu.vector_store %arg17[%c6_32, %c0_33], %98 {strides = array<i32>} : memref<16x64xf32, #tpu.memory_space<vmem>>, vector<2x32xf32>,
    %100 = vector.extract_strided_slice %97 {offsets = [0, 32], sizes = [2, 32], strides = [1, 1]} : vector<2x64xf32> to vector<2x32xf32>
    %c8 = arith.constant 8 : index
    %c32_34 = arith.constant 32 : index
    %101 = vector.load %arg17[%c8, %c32_34] : memref<16x64xf32, #tpu.memory_space<vmem>>, vector<2x32xf32>
    tpu.vector_store %arg17[%c8, %c32_34], %100 {strides = array<i32>} : memref<16x64xf32, #tpu.memory_space<vmem>>, vector<2x32xf32>,
    %c8_35 = arith.constant 8 : index
    %c0_36 = arith.constant 0 : index
    %102 = vector.load %arg16[%c8_35, %c0_36] : memref<16x256xf32, #tpu.memory_space<vmem>>, vector<2x256xf32>
    %cst_37 = arith.constant dense<0.000000e+00> : vector<2x256xf32>
    %103 = tpu.matmul %97, %7, %cst_37 {dimension_numbers = #tpu.dot_dimension_numbers<[1], [0], [0], [1], [0, 0, 1, 1], [], []>} : vector<2x64xf32>, vector<64x256xf32>, vector<2x256xf32> -> vector<2x256xf32>
    %104 = arith.addf %102, %103 : vector<2x256xf32>
    %105 = vector.extract_strided_slice %104 {offsets = [0, 0], sizes = [2, 192], strides = [1, 1]} : vector<2x256xf32> to vector<2x192xf32>
    %106 = arith.negf %105 : vector<2x192xf32>
    %107 = math.exp %106 : vector<2x192xf32>
    %cst_38 = arith.constant 1.000000e+00 : f32
    %108 = vector.broadcast %cst_38 : f32 to vector<2x192xf32>
    %109 = arith.addf %108, %107 : vector<2x192xf32>
    %110 = arith.divf %108, %109 : vector<2x192xf32>
    %111 = vector.extract_strided_slice %104 {offsets = [0, 192], sizes = [2, 64], strides = [1, 1]} : vector<2x256xf32> to vector<2x64xf32>
    %112 = math.tanh %111 : vector<2x64xf32>
    %113 = vector.extract_strided_slice %110 {offsets = [0, 0], sizes = [2, 64], strides = [1, 1]} : vector<2x192xf32> to vector<2x64xf32>
    %114 = vector.extract_strided_slice %110 {offsets = [0, 64], sizes = [2, 64], strides = [1, 1]} : vector<2x192xf32> to vector<2x64xf32>
    %115 = vector.extract_strided_slice %110 {offsets = [0, 128], sizes = [2, 64], strides = [1, 1]} : vector<2x192xf32> to vector<2x64xf32>
    %116 = arith.mulf %114, %95 : vector<2x64xf32>
    %117 = arith.mulf %113, %112 : vector<2x64xf32>
    %118 = arith.addf %116, %117 : vector<2x64xf32>
    %119 = math.tanh %118 : vector<2x64xf32>
    %120 = arith.mulf %115, %119 : vector<2x64xf32>
    %121 = vector.extract_strided_slice %120 {offsets = [0, 0], sizes = [2, 32], strides = [1, 1]} : vector<2x64xf32> to vector<2x32xf32>
    %c8_39 = arith.constant 8 : index
    %c0_40 = arith.constant 0 : index
    %122 = vector.load %arg17[%c8_39, %c0_40] : memref<16x64xf32, #tpu.memory_space<vmem>>, vector<2x32xf32>
    tpu.vector_store %arg17[%c8_39, %c0_40], %121 {strides = array<i32>} : memref<16x64xf32, #tpu.memory_space<vmem>>, vector<2x32xf32>,
    %123 = vector.extract_strided_slice %120 {offsets = [0, 32], sizes = [2, 32], strides = [1, 1]} : vector<2x64xf32> to vector<2x32xf32>
    %c6_41 = arith.constant 6 : index
    %c32_42 = arith.constant 32 : index
    %124 = vector.load %arg17[%c6_41, %c32_42] : memref<16x64xf32, #tpu.memory_space<vmem>>, vector<2x32xf32>
    tpu.vector_store %arg17[%c6_41, %c32_42], %123 {strides = array<i32>} : memref<16x64xf32, #tpu.memory_space<vmem>>, vector<2x32xf32>,
    %c10_43 = arith.constant 10 : index
    %c0_44 = arith.constant 0 : index
    %125 = vector.load %arg16[%c10_43, %c0_44] : memref<16x256xf32, #tpu.memory_space<vmem>>, vector<2x256xf32>
    %cst_45 = arith.constant dense<0.000000e+00> : vector<2x256xf32>
    %126 = tpu.matmul %120, %7, %cst_45 {dimension_numbers = #tpu.dot_dimension_numbers<[1], [0], [0], [1], [0, 0, 1, 1], [], []>} : vector<2x64xf32>, vector<64x256xf32>, vector<2x256xf32> -> vector<2x256xf32>
    %127 = arith.addf %125, %126 : vector<2x256xf32>
    %128 = vector.extract_strided_slice %127 {offsets = [0, 0], sizes = [2, 192], strides = [1, 1]} : vector<2x256xf32> to vector<2x192xf32>
    %129 = arith.negf %128 : vector<2x192xf32>
    %130 = math.exp %129 : vector<2x192xf32>
    %cst_46 = arith.constant 1.000000e+00 : f32
    %131 = vector.broadcast %cst_46 : f32 to vector<2x192xf32>
    %132 = arith.addf %131, %130 : vector<2x192xf32>
    %133 = arith.divf %131, %132 : vector<2x192xf32>
    %134 = vector.extract_strided_slice %127 {offsets = [0, 192], sizes = [2, 64], strides = [1, 1]} : vector<2x256xf32> to vector<2x64xf32>
    %135 = math.tanh %134 : vector<2x64xf32>
    %136 = vector.extract_strided_slice %133 {offsets = [0, 0], sizes = [2, 64], strides = [1, 1]} : vector<2x192xf32> to vector<2x64xf32>
    %137 = vector.extract_strided_slice %133 {offsets = [0, 64], sizes = [2, 64], strides = [1, 1]} : vector<2x192xf32> to vector<2x64xf32>
    %138 = vector.extract_strided_slice %133 {offsets = [0, 128], sizes = [2, 64], strides = [1, 1]} : vector<2x192xf32> to vector<2x64xf32>
    %139 = arith.mulf %137, %118 : vector<2x64xf32>
    %140 = arith.mulf %136, %135 : vector<2x64xf32>
    %141 = arith.addf %139, %140 : vector<2x64xf32>
    %142 = math.tanh %141 : vector<2x64xf32>
    %143 = arith.mulf %138, %142 : vector<2x64xf32>
    %144 = vector.extract_strided_slice %143 {offsets = [0, 0], sizes = [2, 32], strides = [1, 1]} : vector<2x64xf32> to vector<2x32xf32>
    %c10_47 = arith.constant 10 : index
    %c0_48 = arith.constant 0 : index
    %145 = vector.load %arg17[%c10_47, %c0_48] : memref<16x64xf32, #tpu.memory_space<vmem>>, vector<2x32xf32>
    tpu.vector_store %arg17[%c10_47, %c0_48], %144 {strides = array<i32>} : memref<16x64xf32, #tpu.memory_space<vmem>>, vector<2x32xf32>,
    %146 = vector.extract_strided_slice %143 {offsets = [0, 32], sizes = [2, 32], strides = [1, 1]} : vector<2x64xf32> to vector<2x32xf32>
    %c4_49 = arith.constant 4 : index
    %c32_50 = arith.constant 32 : index
    %147 = vector.load %arg17[%c4_49, %c32_50] : memref<16x64xf32, #tpu.memory_space<vmem>>, vector<2x32xf32>
    tpu.vector_store %arg17[%c4_49, %c32_50], %146 {strides = array<i32>} : memref<16x64xf32, #tpu.memory_space<vmem>>, vector<2x32xf32>,
    %c12_51 = arith.constant 12 : index
    %c0_52 = arith.constant 0 : index
    %148 = vector.load %arg16[%c12_51, %c0_52] : memref<16x256xf32, #tpu.memory_space<vmem>>, vector<2x256xf32>
    %cst_53 = arith.constant dense<0.000000e+00> : vector<2x256xf32>
    %149 = tpu.matmul %143, %7, %cst_53 {dimension_numbers = #tpu.dot_dimension_numbers<[1], [0], [0], [1], [0, 0, 1, 1], [], []>} : vector<2x64xf32>, vector<64x256xf32>, vector<2x256xf32> -> vector<2x256xf32>
    %150 = arith.addf %148, %149 : vector<2x256xf32>
    %151 = vector.extract_strided_slice %150 {offsets = [0, 0], sizes = [2, 192], strides = [1, 1]} : vector<2x256xf32> to vector<2x192xf32>
    %152 = arith.negf %151 : vector<2x192xf32>
    %153 = math.exp %152 : vector<2x192xf32>
    %cst_54 = arith.constant 1.000000e+00 : f32
    %154 = vector.broadcast %cst_54 : f32 to vector<2x192xf32>
    %155 = arith.addf %154, %153 : vector<2x192xf32>
    %156 = arith.divf %154, %155 : vector<2x192xf32>
    %157 = vector.extract_strided_slice %150 {offsets = [0, 192], sizes = [2, 64], strides = [1, 1]} : vector<2x256xf32> to vector<2x64xf32>
    %158 = math.tanh %157 : vector<2x64xf32>
    %159 = vector.extract_strided_slice %156 {offsets = [0, 0], sizes = [2, 64], strides = [1, 1]} : vector<2x192xf32> to vector<2x64xf32>
    %160 = vector.extract_strided_slice %156 {offsets = [0, 64], sizes = [2, 64], strides = [1, 1]} : vector<2x192xf32> to vector<2x64xf32>
    %161 = vector.extract_strided_slice %156 {offsets = [0, 128], sizes = [2, 64], strides = [1, 1]} : vector<2x192xf32> to vector<2x64xf32>
    %162 = arith.mulf %160, %141 : vector<2x64xf32>
    %163 = arith.mulf %159, %158 : vector<2x64xf32>
    %164 = arith.addf %162, %163 : vector<2x64xf32>
    %165 = math.tanh %164 : vector<2x64xf32>
    %166 = arith.mulf %161, %165 : vector<2x64xf32>
    %167 = vector.extract_strided_slice %166 {offsets = [0, 0], sizes = [2, 32], strides = [1, 1]} : vector<2x64xf32> to vector<2x32xf32>
    %c12_55 = arith.constant 12 : index
    %c0_56 = arith.constant 0 : index
    %168 = vector.load %arg17[%c12_55, %c0_56] : memref<16x64xf32, #tpu.memory_space<vmem>>, vector<2x32xf32>
    tpu.vector_store %arg17[%c12_55, %c0_56], %167 {strides = array<i32>} : memref<16x64xf32, #tpu.memory_space<vmem>>, vector<2x32xf32>,
    %169 = vector.extract_strided_slice %166 {offsets = [0, 32], sizes = [2, 32], strides = [1, 1]} : vector<2x64xf32> to vector<2x32xf32>
    %c2_57 = arith.constant 2 : index
    %c32_58 = arith.constant 32 : index
    %170 = vector.load %arg17[%c2_57, %c32_58] : memref<16x64xf32, #tpu.memory_space<vmem>>, vector<2x32xf32>
    tpu.vector_store %arg17[%c2_57, %c32_58], %169 {strides = array<i32>} : memref<16x64xf32, #tpu.memory_space<vmem>>, vector<2x32xf32>,
    %c14_59 = arith.constant 14 : index
    %c0_60 = arith.constant 0 : index
    %171 = vector.load %arg16[%c14_59, %c0_60] : memref<16x256xf32, #tpu.memory_space<vmem>>, vector<2x256xf32>
    %cst_61 = arith.constant dense<0.000000e+00> : vector<2x256xf32>
    %172 = tpu.matmul %166, %7, %cst_61 {dimension_numbers = #tpu.dot_dimension_numbers<[1], [0], [0], [1], [0, 0, 1, 1], [], []>} : vector<2x64xf32>, vector<64x256xf32>, vector<2x256xf32> -> vector<2x256xf32>
    %173 = arith.addf %171, %172 : vector<2x256xf32>
    %174 = vector.extract_strided_slice %173 {offsets = [0, 0], sizes = [2, 192], strides = [1, 1]} : vector<2x256xf32> to vector<2x192xf32>
    %175 = arith.negf %174 : vector<2x192xf32>
    %176 = math.exp %175 : vector<2x192xf32>
    %cst_62 = arith.constant 1.000000e+00 : f32
    %177 = vector.broadcast %cst_62 : f32 to vector<2x192xf32>
    %178 = arith.addf %177, %176 : vector<2x192xf32>
    %179 = arith.divf %177, %178 : vector<2x192xf32>
    %180 = vector.extract_strided_slice %173 {offsets = [0, 192], sizes = [2, 64], strides = [1, 1]} : vector<2x256xf32> to vector<2x64xf32>
    %181 = math.tanh %180 : vector<2x64xf32>
    %182 = vector.extract_strided_slice %179 {offsets = [0, 0], sizes = [2, 64], strides = [1, 1]} : vector<2x192xf32> to vector<2x64xf32>
    %183 = vector.extract_strided_slice %179 {offsets = [0, 64], sizes = [2, 64], strides = [1, 1]} : vector<2x192xf32> to vector<2x64xf32>
    %184 = vector.extract_strided_slice %179 {offsets = [0, 128], sizes = [2, 64], strides = [1, 1]} : vector<2x192xf32> to vector<2x64xf32>
    %185 = arith.mulf %183, %164 : vector<2x64xf32>
    %186 = arith.mulf %182, %181 : vector<2x64xf32>
    %187 = arith.addf %185, %186 : vector<2x64xf32>
    %188 = math.tanh %187 : vector<2x64xf32>
    %189 = arith.mulf %184, %188 : vector<2x64xf32>
    %190 = vector.extract_strided_slice %189 {offsets = [0, 0], sizes = [2, 32], strides = [1, 1]} : vector<2x64xf32> to vector<2x32xf32>
    %c14_63 = arith.constant 14 : index
    %c0_64 = arith.constant 0 : index
    %191 = vector.load %arg17[%c14_63, %c0_64] : memref<16x64xf32, #tpu.memory_space<vmem>>, vector<2x32xf32>
    tpu.vector_store %arg17[%c14_63, %c0_64], %190 {strides = array<i32>} : memref<16x64xf32, #tpu.memory_space<vmem>>, vector<2x32xf32>,
    %192 = vector.extract_strided_slice %189 {offsets = [0, 32], sizes = [2, 32], strides = [1, 1]} : vector<2x64xf32> to vector<2x32xf32>
    %c0_65 = arith.constant 0 : index
    %c32_66 = arith.constant 32 : index
    %193 = vector.load %arg17[%c0_65, %c32_66] : memref<16x64xf32, #tpu.memory_space<vmem>>, vector<2x32xf32>
    tpu.vector_store %arg17[%c0_65, %c32_66], %192 {strides = array<i32>} : memref<16x64xf32, #tpu.memory_space<vmem>>, vector<2x32xf32>,
    %c0_67 = arith.constant 0 : index
    %c0_68 = arith.constant 0 : index
    %194 = vector.load %arg17[%c0_67, %c0_68] : memref<16x64xf32, #tpu.memory_space<vmem>>, vector<16x64xf32>
    %c0_69 = arith.constant 0 : index
    %c0_70 = arith.constant 0 : index
    %195 = vector.load %arg1[%c0_69, %c0_70] : memref<16x1xf32, #tpu.memory_space<vmem>>, vector<16x1xf32>
    %196 = vector.broadcast %195 : vector<16x1xf32> to vector<16x64xf32>
    %197 = arith.mulf %194, %196 : vector<16x64xf32>
    %c0_71 = arith.constant 0 : index
    %c0_72 = arith.constant 0 : index
    %198 = vector.load %arg5[%c0_71, %c0_72] : memref<64x128xf32, #tpu.memory_space<vmem>>, vector<64x128xf32>
    %cst_73 = arith.constant dense<0.000000e+00> : vector<16x128xf32>
    %199 = tpu.matmul %197, %198, %cst_73 {dimension_numbers = #tpu.dot_dimension_numbers<[1], [0], [0], [1], [0, 0, 1, 1], [], []>} : vector<16x64xf32>, vector<64x128xf32>, vector<16x128xf32> -> vector<16x128xf32>
    %c0_74 = arith.constant 0 : index
    %c0_75 = arith.constant 0 : index
    %200 = vector.load %arg6[%c0_74, %c0_75] : memref<1x128xf32, #tpu.memory_space<vmem>>, vector<1x128xf32>
    %201 = vector.broadcast %200 : vector<1x128xf32> to vector<16x128xf32>
    %202 = arith.addf %199, %201 : vector<16x128xf32>
    %cst_76 = arith.constant 0.000000e+00 : f32
    %203 = vector.broadcast %cst_76 : f32 to vector<16x128xf32>
    %204 = arith.maximumf %202, %203 : vector<16x128xf32>
    %c0_77 = arith.constant 0 : index
    %c0_78 = arith.constant 0 : index
    %205 = vector.load %arg7[%c0_77, %c0_78] : memref<1x128xf32, #tpu.memory_space<vmem>>, vector<1x128xf32>
    %c0_79 = arith.constant 0 : index
    %c0_80 = arith.constant 0 : index
    %206 = vector.load %arg8[%c0_79, %c0_80] : memref<1x128xf32, #tpu.memory_space<vmem>>, vector<1x128xf32>
    %cst_81 = arith.constant dense<0.000000e+00> : vector<16xf32>
    %207 = vector.multi_reduction <add>, %204, %cst_81 [1] : vector<16x128xf32> to vector<16xf32>
    %208 = vector.shape_cast %207 : vector<16xf32> to vector<16x1xf32>
    %cst_82 = arith.constant 1.280000e+02 : f32
    %209 = vector.broadcast %cst_82 : f32 to vector<16x1xf32>
    %210 = arith.divf %208, %209 : vector<16x1xf32>
    %211 = vector.broadcast %210 : vector<16x1xf32> to vector<16x128xf32>
    %212 = arith.subf %204, %211 : vector<16x128xf32>
    %213 = arith.mulf %212, %212 : vector<16x128xf32>
    %cst_83 = arith.constant dense<0.000000e+00> : vector<16xf32>
    %214 = vector.multi_reduction <add>, %213, %cst_83 [1] : vector<16x128xf32> to vector<16xf32>
    %215 = vector.shape_cast %214 : vector<16xf32> to vector<16x1xf32>
    %cst_84 = arith.constant 1.280000e+02 : f32
    %216 = vector.broadcast %cst_84 : f32 to vector<16x1xf32>
    %217 = arith.divf %215, %216 : vector<16x1xf32>
    %218 = vector.broadcast %210 : vector<16x1xf32> to vector<16x128xf32>
    %219 = arith.subf %204, %218 : vector<16x128xf32>
    %cst_85 = arith.constant 9.99999974E-6 : f32
    %220 = vector.broadcast %cst_85 : f32 to vector<16x1xf32>
    %221 = arith.addf %217, %220 : vector<16x1xf32>
    %222 = math.rsqrt %221 : vector<16x1xf32>
    %223 = vector.broadcast %222 : vector<16x1xf32> to vector<16x128xf32>
    %224 = arith.mulf %219, %223 : vector<16x128xf32>
    %225 = vector.broadcast %205 : vector<1x128xf32> to vector<16x128xf32>
    %226 = arith.mulf %224, %225 : vector<16x128xf32>
    %227 = vector.broadcast %206 : vector<1x128xf32> to vector<16x128xf32>
    %228 = arith.addf %226, %227 : vector<16x128xf32>
    %c0_86 = arith.constant 0 : index
    %c0_87 = arith.constant 0 : index
    %229 = vector.load %arg9[%c0_86, %c0_87] : memref<128x128xf32, #tpu.memory_space<vmem>>, vector<128x128xf32>
    %cst_88 = arith.constant dense<0.000000e+00> : vector<16x128xf32>
    %230 = tpu.matmul %228, %229, %cst_88 {dimension_numbers = #tpu.dot_dimension_numbers<[1], [0], [0], [1], [0, 0, 1, 1], [], []>} : vector<16x128xf32>, vector<128x128xf32>, vector<16x128xf32> -> vector<16x128xf32>
    %c0_89 = arith.constant 0 : index
    %c0_90 = arith.constant 0 : index
    %231 = vector.load %arg10[%c0_89, %c0_90] : memref<1x128xf32, #tpu.memory_space<vmem>>, vector<1x128xf32>
    %232 = vector.broadcast %231 : vector<1x128xf32> to vector<16x128xf32>
    %233 = arith.addf %230, %232 : vector<16x128xf32>
    %cst_91 = arith.constant 0.000000e+00 : f32
    %234 = vector.broadcast %cst_91 : f32 to vector<16x128xf32>
    %235 = arith.maximumf %233, %234 : vector<16x128xf32>
    %c0_92 = arith.constant 0 : index
    %c0_93 = arith.constant 0 : index
    %236 = vector.load %arg11[%c0_92, %c0_93] : memref<1x128xf32, #tpu.memory_space<vmem>>, vector<1x128xf32>
    %c0_94 = arith.constant 0 : index
    %c0_95 = arith.constant 0 : index
    %237 = vector.load %arg12[%c0_94, %c0_95] : memref<1x128xf32, #tpu.memory_space<vmem>>, vector<1x128xf32>
    %cst_96 = arith.constant dense<0.000000e+00> : vector<16xf32>
    %238 = vector.multi_reduction <add>, %235, %cst_96 [1] : vector<16x128xf32> to vector<16xf32>
    %239 = vector.shape_cast %238 : vector<16xf32> to vector<16x1xf32>
    %cst_97 = arith.constant 1.280000e+02 : f32
    %240 = vector.broadcast %cst_97 : f32 to vector<16x1xf32>
    %241 = arith.divf %239, %240 : vector<16x1xf32>
    %242 = vector.broadcast %241 : vector<16x1xf32> to vector<16x128xf32>
    %243 = arith.subf %235, %242 : vector<16x128xf32>
    %244 = arith.mulf %243, %243 : vector<16x128xf32>
    %cst_98 = arith.constant dense<0.000000e+00> : vector<16xf32>
    %245 = vector.multi_reduction <add>, %244, %cst_98 [1] : vector<16x128xf32> to vector<16xf32>
    %246 = vector.shape_cast %245 : vector<16xf32> to vector<16x1xf32>
    %cst_99 = arith.constant 1.280000e+02 : f32
    %247 = vector.broadcast %cst_99 : f32 to vector<16x1xf32>
    %248 = arith.divf %246, %247 : vector<16x1xf32>
    %249 = vector.broadcast %241 : vector<16x1xf32> to vector<16x128xf32>
    %250 = arith.subf %235, %249 : vector<16x128xf32>
    %cst_100 = arith.constant 9.99999974E-6 : f32
    %251 = vector.broadcast %cst_100 : f32 to vector<16x1xf32>
    %252 = arith.addf %248, %251 : vector<16x1xf32>
    %253 = math.rsqrt %252 : vector<16x1xf32>
    %254 = vector.broadcast %253 : vector<16x1xf32> to vector<16x128xf32>
    %255 = arith.mulf %250, %254 : vector<16x128xf32>
    %256 = vector.broadcast %236 : vector<1x128xf32> to vector<16x128xf32>
    %257 = arith.mulf %255, %256 : vector<16x128xf32>
    %258 = vector.broadcast %237 : vector<1x128xf32> to vector<16x128xf32>
    %259 = arith.addf %257, %258 : vector<16x128xf32>
    %c0_101 = arith.constant 0 : index
    %c0_102 = arith.constant 0 : index
    %260 = vector.load %arg13[%c0_101, %c0_102] : memref<128x128xf32, #tpu.memory_space<vmem>>, vector<128x128xf32>
    %cst_103 = arith.constant dense<0.000000e+00> : vector<16x128xf32>
    %261 = tpu.matmul %259, %260, %cst_103 {dimension_numbers = #tpu.dot_dimension_numbers<[1], [0], [0], [1], [0, 0, 1, 1], [], []>} : vector<16x128xf32>, vector<128x128xf32>, vector<16x128xf32> -> vector<16x128xf32>
    %c0_104 = arith.constant 0 : index
    %c0_105 = arith.constant 0 : index
    %262 = vector.load %arg14[%c0_104, %c0_105] : memref<1x128xf32, #tpu.memory_space<vmem>>, vector<1x128xf32>
    %263 = vector.broadcast %262 : vector<1x128xf32> to vector<16x128xf32>
    %264 = arith.addf %261, %263 : vector<16x128xf32>
    %c0_106 = arith.constant 0 : index
    %c0_107 = arith.constant 0 : index
    %265 = vector.load %arg15[%c0_106, %c0_107] : memref<16x128xf32, #tpu.memory_space<vmem>>, vector<16x128xf32>
    tpu.vector_store %arg15[%c0_106, %c0_107], %264 {strides = array<i32>} : memref<16x128xf32, #tpu.memory_space<vmem>>, vector<16x128xf32>,
    return
  }
}

</mosaic_0001>

<llo_original>
// kernel: clan_lstm_batch_forward.1
$region0: #{clan_lstm_batch_forward.1}
  #allocation0 [shape = 'u32[]', space=smem, size = 0x4, offset = 0x4, fixed_abs, tag = 'smem constant byte address 0x4 - core index']
  #allocation1 [shape = 'u32[72,128]{1,0:T(1,128)}', space=vmem, size = 0x9000, scoped, tag = 'internal scratch']
  #allocation2 [shape = 'f32[16,256]{1,0:T(8,128)}', space=vmem, size = 0x4000, scoped, tag = 'scratch operand']
  #allocation3 [shape = 'f32[16,64]{1,0:T(8,128)}', space=vmem, size = 0x2000, scoped, tag = 'scratch operand']
  %s0 = inlined_call_operand.vmem [shape: f32[16,66], index: 0, kind: input, shape index: {}]
  %s1 = inlined_call_operand.vmem [shape: f32[16,1], index: 1, kind: input, shape index: {}]
  %s2 = inlined_call_operand.vmem [shape: f32[66,256], index: 2, kind: input, shape index: {}]
  %s3 = inlined_call_operand.vmem [shape: f32[64,256], index: 3, kind: input, shape index: {}]
  %s4 = inlined_call_operand.vmem [shape: f32[1,256], index: 4, kind: input, shape index: {}]
  %s5 = inlined_call_operand.vmem [shape: f32[64,128], index: 5, kind: input, shape index: {}]
  %s6 = inlined_call_operand.vmem [shape: f32[1,128], index: 6, kind: input, shape index: {}]
  %s7 = inlined_call_operand.vmem [shape: f32[1,128], index: 7, kind: input, shape index: {}]
  %s8 = inlined_call_operand.vmem [shape: f32[1,128], index: 8, kind: input, shape index: {}]
  %s9 = inlined_call_operand.vmem [shape: f32[128,128], index: 9, kind: input, shape index: {}]
  %s10 = inlined_call_operand.vmem [shape: f32[1,128], index: 10, kind: input, shape index: {}]
  %s11 = inlined_call_operand.vmem [shape: f32[1,128], index: 11, kind: input, shape index: {}]
  %s12 = inlined_call_operand.vmem [shape: f32[1,128], index: 12, kind: input, shape index: {}]
  %s13 = inlined_call_operand.vmem [shape: f32[128,128], index: 13, kind: input, shape index: {}]
  %s14 = inlined_call_operand.vmem [shape: f32[1,128], index: 14, kind: input, shape index: {}]
  %s15 = inlined_call_operand.vmem [shape: f32[16,128], index: 15, kind: output, shape index: {}]
  %s16 = sld [smem:[#allocation0]]
  $region70: #{clan_lstm_batch_forward.1} parent=0
    _
  %s18 = ssub.s32 1, %s16
  %s19 = scalar_select 0, %s18, %s16
  // Predicated region
  $region2: #{clan_lstm_batch_forward.1} parent=0 // pred_check
    _
  $region3: #{clan_lstm_batch_forward.1} parent=0 // pred_check_branch
    %21 = sbr.rel (0) target = $region5
  $region4: #{clan_lstm_batch_forward.1} parent=0 // pred_region
    _
  $region5: #{clan_lstm_batch_forward.1} parent=0 // pred_fallthru
    _
  // Predicated region
  $region6: #{clan_lstm_batch_forward.1} parent=0 // pred_check
    _
  $region7: #{clan_lstm_batch_forward.1} parent=0 // pred_check_branch
    %23 = sbr.rel (0) target = $region9
  $region8: #{clan_lstm_batch_forward.1} parent=0 // pred_region
    _
  $region9: #{clan_lstm_batch_forward.1} parent=0 // pred_fallthru
    _
  // Predicated region
  $region10: #{clan_lstm_batch_forward.1} parent=0 // pred_check
    _
  $region11: #{clan_lstm_batch_forward.1} parent=0 // pred_check_branch
    %25 = sbr.rel (0) target = $region13
  $region12: #{clan_lstm_batch_forward.1} parent=0 // pred_region
    _
  $region13: #{clan_lstm_batch_forward.1} parent=0 // pred_fallthru
    _
  // Predicated region
  $region14: #{clan_lstm_batch_forward.1} parent=0 // pred_check
    _
  $region15: #{clan_lstm_batch_forward.1} parent=0 // pred_check_branch
    %27 = sbr.rel (0) target = $region17
  $region16: #{clan_lstm_batch_forward.1} parent=0 // pred_region
    _
  $region17: #{clan_lstm_batch_forward.1} parent=0 // pred_fallthru
    _
  // Predicated region
  $region18: #{clan_lstm_batch_forward.1} parent=0 // pred_check
    _
  $region19: #{clan_lstm_batch_forward.1} parent=0 // pred_check_branch
    %29 = sbr.rel (0) target = $region21
  $region20: #{clan_lstm_batch_forward.1} parent=0 // pred_region
    _
  $region21: #{clan_lstm_batch_forward.1} parent=0 // pred_fallthru
    _
  // Predicated region
  $region22: #{clan_lstm_batch_forward.1} parent=0 // pred_check
    _
  $region23: #{clan_lstm_batch_forward.1} parent=0 // pred_check_branch
    %31 = sbr.rel (0) target = $region25
  $region24: #{clan_lstm_batch_forward.1} parent=0 // pred_region
    _
  $region25: #{clan_lstm_batch_forward.1} parent=0 // pred_fallthru
    _
  // Predicated region
  $region26: #{clan_lstm_batch_forward.1} parent=0 // pred_check
    _
  $region27: #{clan_lstm_batch_forward.1} parent=0 // pred_check_branch
    %33 = sbr.rel (0) target = $region29
  $region28: #{clan_lstm_batch_forward.1} parent=0 // pred_region
    _
  $region29: #{clan_lstm_batch_forward.1} parent=0 // pred_fallthru
    _
  // Predicated region
  $region30: #{clan_lstm_batch_forward.1} parent=0 // pred_check
    _
  $region31: #{clan_lstm_batch_forward.1} parent=0 // pred_check_branch
    %35 = sbr.rel (0) target = $region33
  $region32: #{clan_lstm_batch_forward.1} parent=0 // pred_region
    _
  $region33: #{clan_lstm_batch_forward.1} parent=0 // pred_fallthru
    _
  // Predicated region
  $region34: #{clan_lstm_batch_forward.1} parent=0 // pred_check
    _
  $region35: #{clan_lstm_batch_forward.1} parent=0 // pred_check_branch
    %37 = sbr.rel (0) target = $region37
  $region36: #{clan_lstm_batch_forward.1} parent=0 // pred_region
    _
  $region37: #{clan_lstm_batch_forward.1} parent=0 // pred_fallthru
    _
  // Predicated region
  $region38: #{clan_lstm_batch_forward.1} parent=0 // pred_check
    _
  $region39: #{clan_lstm_batch_forward.1} parent=0 // pred_check_branch
    %39 = sbr.rel (0) target = $region41
  $region40: #{clan_lstm_batch_forward.1} parent=0 // pred_region
    _
  $region41: #{clan_lstm_batch_forward.1} parent=0 // pred_fallthru
    _
  // Predicated region
  $region42: #{clan_lstm_batch_forward.1} parent=0 // pred_check
    _
  $region43: #{clan_lstm_batch_forward.1} parent=0 // pred_check_branch
    %41 = sbr.rel (0) target = $region45
  $region44: #{clan_lstm_batch_forward.1} parent=0 // pred_region
    _
  $region45: #{clan_lstm_batch_forward.1} parent=0 // pred_fallthru
    _
  // Predicated region
  $region46: #{clan_lstm_batch_forward.1} parent=0 // pred_check
    _
  $region47: #{clan_lstm_batch_forward.1} parent=0 // pred_check_branch
    %43 = sbr.rel (0) target = $region49
  $region48: #{clan_lstm_batch_forward.1} parent=0 // pred_region
    _
  $region49: #{clan_lstm_batch_forward.1} parent=0 // pred_fallthru
    _
  // Predicated region
  $region50: #{clan_lstm_batch_forward.1} parent=0 // pred_check
    _
  $region51: #{clan_lstm_batch_forward.1} parent=0 // pred_check_branch
    %45 = sbr.rel (0) target = $region53
  $region52: #{clan_lstm_batch_forward.1} parent=0 // pred_region
    _
  $region53: #{clan_lstm_batch_forward.1} parent=0 // pred_fallthru
    _
  // Predicated region
  $region54: #{clan_lstm_batch_forward.1} parent=0 // pred_check
    _
  $region55: #{clan_lstm_batch_forward.1} parent=0 // pred_check_branch
    %47 = sbr.rel (0) target = $region57
  $region56: #{clan_lstm_batch_forward.1} parent=0 // pred_region
    _
  $region57: #{clan_lstm_batch_forward.1} parent=0 // pred_fallthru
    _
  // Predicated region
  $region58: #{clan_lstm_batch_forward.1} parent=0 // pred_check
    _
  $region59: #{clan_lstm_batch_forward.1} parent=0 // pred_check_branch
    %49 = sbr.rel (0) target = $region61
  $region60: #{clan_lstm_batch_forward.1} parent=0 // pred_region
    _
  $region61: #{clan_lstm_batch_forward.1} parent=0 // pred_fallthru
    _
  %v50 = vld [vmem:[%s0] sm:$0xff]
  %v51 = vld [vmem:[%s0 + $0x8] sm:$0xff]
  %v52 = vld [vmem:[%s2] sm:$0xff]
  %v53 = vld [vmem:[%s2 + $0x8] sm:$0xff]
  %v54 = vld [vmem:[%s2 + $0x10] sm:$0xff]
  %v55 = vld [vmem:[%s2 + $0x18] sm:$0xff]
  %v56 = vld [vmem:[%s2 + $0x20] sm:$0xff]
  %v57 = vld [vmem:[%s2 + $0x28] sm:$0xff]
  %v58 = vld [vmem:[%s2 + $0x30] sm:$0xff]
  %v59 = vld [vmem:[%s2 + $0x38] sm:$0xff]
  %v60 = vld [vmem:[%s2 + $0x40] sm:$0xff]
  %v61 = vld [vmem:[%s2 + $0x48] sm:$0xff]
  %v62 = vld [vmem:[%s2 + $0x50] sm:$0xff]
  %v63 = vld [vmem:[%s2 + $0x58] sm:$0xff]
  %v64 = vld [vmem:[%s2 + $0x60] sm:$0xff]
  %v65 = vld [vmem:[%s2 + $0x68] sm:$0xff]
  %v66 = vld [vmem:[%s2 + $0x70] sm:$0xff]
  %v67 = vld [vmem:[%s2 + $0x78] sm:$0xff]
  %v68 = vld [vmem:[%s2 + $0x80] sm:$0x3]
  %v69 = vld [vmem:[%s2 + $0x88] sm:$0x3]
  %v70 = vld [vmem:[%s4] sm:$0x3]
  %v72 = vperm.slane %v70, 0
  %v73 = vperm.slane %v70, 1
  %vm76 = vcmask 539648
  %v78 = vsel %vm76, %v50, 0
  %v81 = vsel %vm76, %v51, 0
  %vm83 = vcmask 1041408
  %v85 = vsel %vm83, %v68, 0
  %v88 = vsel %vm83, %v69, 0
  %90 = vmatpush.msra.mxu0 0.0
  %91 = vmatpush.msra.mxu0 0.0
  %92 = vmatpush.msra.mxu0 0.0
  %93 = vmatpush.msra.mxu0 0.0
  %94 = vmatpush.msra.mxu0 0.0
  %95 = vmatpush.msra.mxu0 0.0
  %96 = vmatpush.msra.mxu0 0.0
  %97 = vmatpush.msra.mxu0 %v85
  %98 = vmatpush.msra.mxu0 %v66
  %99 = vmatpush.msra.mxu0 %v64
  %100 = vmatpush.msra.mxu0 %v62
  %101 = vmatpush.msra.mxu0 %v60
  %102 = vmatpush.msra.mxu0 %v58
  %103 = vmatpush.msra.mxu0 %v56
  %104 = vmatpush.msra.mxu0 %v54
  %105 = vmatpush.msra.mxu0 %v52
  %106 = vmatmul.f32.gmra.mxu0 %v78
  %v107 = vpop.f32.mrf.mxu0
  %v108 = vadd.f32 %v72, %v107
  %109 = vmatmul.f32.gmra.mxu0 %v81
  %v110 = vpop.f32.mrf.mxu0
  %v111 = vadd.f32 %v72, %v110
  %112 = vdwg.mxu0
  %113 = vmatpush.msra.mxu0 0.0
  %114 = vmatpush.msra.mxu0 0.0
  %115 = vmatpush.msra.mxu0 0.0
  %116 = vmatpush.msra.mxu0 0.0
  %117 = vmatpush.msra.mxu0 0.0
  %118 = vmatpush.msra.mxu0 0.0
  %119 = vmatpush.msra.mxu0 0.0
  %120 = vmatpush.msra.mxu0 %v88
  %121 = vmatpush.msra.mxu0 %v67
  %122 = vmatpush.msra.mxu0 %v65
  %123 = vmatpush.msra.mxu0 %v63
  %124 = vmatpush.msra.mxu0 %v61
  %125 = vmatpush.msra.mxu0 %v59
  %126 = vmatpush.msra.mxu0 %v57
  %127 = vmatpush.msra.mxu0 %v55
  %128 = vmatpush.msra.mxu0 %v53
  %129 = vmatmul.f32.gmra.mxu0 %v78
  %v130 = vpop.f32.mrf.mxu0
  %v131 = vadd.f32 %v73, %v130
  %132 = vmatmul.f32.gmra.mxu0 %v81
  %v133 = vpop.f32.mrf.mxu0
  %v134 = vadd.f32 %v73, %v133
  %135 = vdwg.mxu0
  %136 = vst [vmem:[#allocation2] sm:$0xff] %v108
  %137 = vst [vmem:[#allocation2 + $0x8] sm:$0xff] %v131
  %138 = vst [vmem:[#allocation2 + $0x10] sm:$0xff] %v111
  %139 = vst [vmem:[#allocation2 + $0x18] sm:$0xff] %v134
  %v140 = vld [vmem:[%s3] sm:$0xff]
  %v141 = vld [vmem:[%s3 + $0x8] sm:$0xff]
  %v142 = vld [vmem:[%s3 + $0x10] sm:$0xff]
  %v143 = vld [vmem:[%s3 + $0x18] sm:$0xff]
  %v144 = vld [vmem:[%s3 + $0x20] sm:$0xff]
  %v145 = vld [vmem:[%s3 + $0x28] sm:$0xff]
  %v146 = vld [vmem:[%s3 + $0x30] sm:$0xff]
  %v147 = vld [vmem:[%s3 + $0x38] sm:$0xff]
  %v148 = vld [vmem:[%s3 + $0x40] sm:$0xff]
  %v149 = vld [vmem:[%s3 + $0x48] sm:$0xff]
  %v150 = vld [vmem:[%s3 + $0x50] sm:$0xff]
  %v151 = vld [vmem:[%s3 + $0x58] sm:$0xff]
  %v152 = vld [vmem:[%s3 + $0x60] sm:$0xff]
  %v153 = vld [vmem:[%s3 + $0x68] sm:$0xff]
  %v154 = vld [vmem:[%s3 + $0x70] sm:$0xff]
  %v155 = vld [vmem:[%s3 + $0x78] sm:$0xff]
  %v156 = vld [vmem:[#allocation2] sm:$0x3]
  %v157 = vld [vmem:[#allocation2 + $0x8] sm:$0x3]
  %vm158 = vcmask 523264
  %v160 = vsel %vm158, 0.0, 0
  %162 = vmatpush.msra.mxu0 0.0
  %163 = vmatpush.msra.mxu0 0.0
  %164 = vmatpush.msra.mxu0 0.0
  %165 = vmatpush.msra.mxu0 0.0
  %166 = vmatpush.msra.mxu0 0.0
  %167 = vmatpush.msra.mxu0 0.0
  %168 = vmatpush.msra.mxu0 0.0
  %169 = vmatpush.msra.mxu0 0.0
  %170 = vmatpush.msra.mxu0 %v154
  %171 = vmatpush.msra.mxu0 %v152
  %172 = vmatpush.msra.mxu0 %v150
  %173 = vmatpush.msra.mxu0 %v148
  %174 = vmatpush.msra.mxu0 %v146
  %175 = vmatpush.msra.mxu0 %v144
  %176 = vmatpush.msra.mxu0 %v142
  %177 = vmatpush.msra.mxu0 %v140
  %178 = vmatmul.f32.gmra.mxu0 %v160
  %v179 = vpop.f32.mrf.mxu0
  %v180 = vadd.f32 0.0, %v179
  %181 = vdwg.mxu0
  %182 = vmatpush.msra.mxu0 0.0
  %183 = vmatpush.msra.mxu0 0.0
  %184 = vmatpush.msra.mxu0 0.0
  %185 = vmatpush.msra.mxu0 0.0
  %186 = vmatpush.msra.mxu0 0.0
  %187 = vmatpush.msra.mxu0 0.0
  %188 = vmatpush.msra.mxu0 0.0
  %189 = vmatpush.msra.mxu0 0.0
  %190 = vmatpush.msra.mxu0 %v155
  %191 = vmatpush.msra.mxu0 %v153
  %192 = vmatpush.msra.mxu0 %v151
  %193 = vmatpush.msra.mxu0 %v149
  %194 = vmatpush.msra.mxu0 %v147
  %195 = vmatpush.msra.mxu0 %v145
  %196 = vmatpush.msra.mxu0 %v143
  %197 = vmatpush.msra.mxu0 %v141
  %198 = vmatmul.f32.gmra.mxu0 %v160
  %v199 = vpop.f32.mrf.mxu0
  %v200 = vadd.f32 0.0, %v199
  %201 = vdwg.mxu0
  %v202 = vadd.f32 %v156, %v180
  %v203 = vadd.f32 %v157, %v200
  %v204 = vxor.u32 %v202, 2147483648
  %v205 = vxor.u32 %v203, 2147483648
  %v206 = vmul.f32 %v204, 1.442695
  %v207 = vpow.pop %v206
  %v208 = vmul.f32 %v205, 1.442695
  %v209 = vpow.pop %v208
  %v210 = vadd.f32 %v207, 1.0
  %v211 = vadd.f32 %v209, 1.0
  %v212 = vrcp.pop %v210
  %v213 = vmul.f32 %v210, %v212
  %v214 = vsub.f32 1.0, %v213
  %v215 = vmul.f32 %v212, %v214
  %v216 = vadd.f32 %v212, %v215
  %vm217 = vweird.f32 %v210
  %vm218 = vweird.f32 %v212
  %vm219 = vmor %vm217, %vm218
  %v220 = vsel %vm219, %v212, %v216
  %v221 = vand.u32 2147483647, %v210
  %vm222 = vcmp.eq.f32.partialorder %v221, 8.507059e+37
  %v223 = vand.u32 %v210, 2147483648
  %v224 = vor.u32 1.1754944e-38, %v223
  %v225 = vsel %vm222, %v224, %v220
  %v226 = vmul.f32 1.0, %v225
  %v227 = vrcp.pop %v211
  %v228 = vmul.f32 %v211, %v227
  %v229 = vsub.f32 1.0, %v228
  %v230 = vmul.f32 %v227, %v229
  %v231 = vadd.f32 %v227, %v230
  %vm232 = vweird.f32 %v211
  %vm233 = vweird.f32 %v227
  %vm234 = vmor %vm232, %vm233
  %v235 = vsel %vm234, %v227, %v231
  %v236 = vand.u32 2147483647, %v211
  %vm237 = vcmp.eq.f32.partialorder %v236, 8.507059e+37
  %v238 = vand.u32 %v211, 2147483648
  %v239 = vor.u32 1.1754944e-38, %v238
  %v240 = vsel %vm237, %v239, %v235
  %v241 = vmul.f32 1.0, %v240
  %v242 = vtanh.pop %v203
  %v243 = vmul.f32 %v226, 0.0
  %245 = vrot.lane.b32.xlu0 %v242, 64
  %v246 = vpop.permute.xlu0 %245
  %v248 = vmul.f32 %v226, %v246
  %250 = vrot.lane.b32.xlu0 %v248, 64
  %v251 = vpop.permute.xlu0 %250
  %v253 = vadd.f32 %v243, %v251
  %v254 = vtanh.pop %v253
  %256 = vrot.lane.b32.xlu0 %v254, 64
  %v257 = vpop.permute.xlu0 %256
  %v259 = vmul.f32 %v241, %v257
  %vm260 = vcmask 254976
  %261 = vst.msk [vmem:[#allocation3] sm:$0x3] %vm260, %v259
  %vm262 = vcmask 517376
  %263 = vst.msk [vmem:[#allocation3 + $0xe] sm:$0x3] %vm262, %v259
  %v264 = vld [vmem:[#allocation2] sm:$0xc]
  %v265 = vld [vmem:[#allocation2 + $0x8] sm:$0xc]
  %v267 = vsel %vm158, %v259, 0
  %269 = vmatpush.msra.mxu0 0.0
  %270 = vmatpush.msra.mxu0 0.0
  %271 = vmatpush.msra.mxu0 0.0
  %272 = vmatpush.msra.mxu0 0.0
  %273 = vmatpush.msra.mxu0 0.0
  %274 = vmatpush.msra.mxu0 0.0
  %275 = vmatpush.msra.mxu0 0.0
  %276 = vmatpush.msra.mxu0 0.0
  %277 = vmatpush.msra.mxu0 %v154
  %278 = vmatpush.msra.mxu0 %v152
  %279 = vmatpush.msra.mxu0 %v150
  %280 = vmatpush.msra.mxu0 %v148
  %281 = vmatpush.msra.mxu0 %v146
  %282 = vmatpush.msra.mxu0 %v144
  %283 = vmatpush.msra.mxu0 %v142
  %284 = vmatpush.msra.mxu0 %v140
  %285 = vmatmul.f32.gmra.mxu0 %v267
  %v286 = vpop.f32.mrf.mxu0
  %v287 = vadd.f32 0.0, %v286
  %288 = vdwg.mxu0
  %289 = vmatpush.msra.mxu0 0.0
  %290 = vmatpush.msra.mxu0 0.0
  %291 = vmatpush.msra.mxu0 0.0
  %292 = vmatpush.msra.mxu0 0.0
  %293 = vmatpush.msra.mxu0 0.0
  %294 = vmatpush.msra.mxu0 0.0
  %295 = vmatpush.msra.mxu0 0.0
  %296 = vmatpush.msra.mxu0 0.0
  %297 = vmatpush.msra.mxu0 %v155
  %298 = vmatpush.msra.mxu0 %v153
  %299 = vmatpush.msra.mxu0 %v151
  %300 = vmatpush.msra.mxu0 %v149
  %301 = vmatpush.msra.mxu0 %v147
  %302 = vmatpush.msra.mxu0 %v145
  %303 = vmatpush.msra.mxu0 %v143
  %304 = vmatpush.msra.mxu0 %v141
  %305 = vmatmul.f32.gmra.mxu0 %v267
  %v306 = vpop.f32.mrf.mxu0
  %v307 = vadd.f32 0.0, %v306
  %308 = vdwg.mxu0
  %v311 = vrot.slane %v287, 6
  %v312 = vrot.slane %v307, 6
  %v315 = vadd.f32 %v264, %v311
  %v316 = vadd.f32 %v265, %v312
  %v317 = vxor.u32 %v315, 2147483648
  %v318 = vxor.u32 %v316, 2147483648
  %v319 = vmul.f32 %v317, 1.442695
  %v320 = vpow.pop %v319
  %v321 = vmul.f32 %v318, 1.442695
  %v322 = vpow.pop %v321
  %v323 = vadd.f32 %v320, 1.0
  %v324 = vadd.f32 %v322, 1.0
  %v325 = vrcp.pop %v323
  %v326 = vmul.f32 %v323, %v325
  %v327 = vsub.f32 1.0, %v326
  %v328 = vmul.f32 %v325, %v327
  %v329 = vadd.f32 %v325, %v328
  %vm330 = vweird.f32 %v323
  %vm331 = vweird.f32 %v325
  %vm332 = vmor %vm330, %vm331
  %v333 = vsel %vm332, %v325, %v329
  %v334 = vand.u32 2147483647, %v323
  %vm335 = vcmp.eq.f32.partialorder %v334, 8.507059e+37
  %v336 = vand.u32 %v323, 2147483648
  %v337 = vor.u32 1.1754944e-38, %v336
  %v338 = vsel %vm335, %v337, %v333
  %v339 = vmul.f32 1.0, %v338
  %v340 = vrcp.pop %v324
  %v341 = vmul.f32 %v324, %v340
  %v342 = vsub.f32 1.0, %v341
  %v343 = vmul.f32 %v340, %v342
  %v344 = vadd.f32 %v340, %v343
  %vm345 = vweird.f32 %v324
  %vm346 = vweird.f32 %v340
  %vm347 = vmor %vm345, %vm346
  %v348 = vsel %vm347, %v340, %v344
  %v349 = vand.u32 2147483647, %v324
  %vm350 = vcmp.eq.f32.partialorder %v349, 8.507059e+37
  %v351 = vand.u32 %v324, 2147483648
  %v352 = vor.u32 1.1754944e-38, %v351
  %v353 = vsel %vm350, %v352, %v348
  %v354 = vmul.f32 1.0, %v353
  %v355 = vtanh.pop %v316
  %v357 = vrot.slane %v253, 6
  %v359 = vmul.f32 %v339, %v357
  %361 = vrot.lane.b32.xlu0 %v355, 64
  %v362 = vpop.permute.xlu0 %361
  %v364 = vmul.f32 %v339, %v362
  %366 = vrot.lane.b32.xlu0 %v364, 64
  %v367 = vpop.permute.xlu0 %366
  %v369 = vadd.f32 %v359, %v367
  %v370 = vtanh.pop %v369
  %372 = vrot.lane.b32.xlu0 %v370, 64
  %v373 = vpop.permute.xlu0 %372
  %v375 = vmul.f32 %v354, %v373
  %vm376 = vcmask 257026
  %377 = vst.msk [vmem:[#allocation3] sm:$0xc] %vm376, %v375
  %vm378 = vcmask 519426
  %379 = vst.msk [vmem:[#allocation3 + $0xa] sm:$0xc] %vm378, %v375
  %v380 = vld [vmem:[#allocation2] sm:$0x30]
  %v381 = vld [vmem:[#allocation2 + $0x8] sm:$0x30]
  %v383 = vrot.slane %v375, 2
  %v384 = vsel %vm158, %v383, 0
  %386 = vmatpush.msra.mxu0 0.0
  %387 = vmatpush.msra.mxu0 0.0
  %388 = vmatpush.msra.mxu0 0.0
  %389 = vmatpush.msra.mxu0 0.0
  %390 = vmatpush.msra.mxu0 0.0
  %391 = vmatpush.msra.mxu0 0.0
  %392 = vmatpush.msra.mxu0 0.0
  %393 = vmatpush.msra.mxu0 0.0
  %394 = vmatpush.msra.mxu0 %v154
  %395 = vmatpush.msra.mxu0 %v152
  %396 = vmatpush.msra.mxu0 %v150
  %397 = vmatpush.msra.mxu0 %v148
  %398 = vmatpush.msra.mxu0 %v146
  %399 = vmatpush.msra.mxu0 %v144
  %400 = vmatpush.msra.mxu0 %v142
  %401 = vmatpush.msra.mxu0 %v140
  %402 = vmatmul.f32.gmra.mxu0 %v384
  %v403 = vpop.f32.mrf.mxu0
  %v404 = vadd.f32 0.0, %v403
  %405 = vdwg.mxu0
  %406 = vmatpush.msra.mxu0 0.0
  %407 = vmatpush.msra.mxu0 0.0
  %408 = vmatpush.msra.mxu0 0.0
  %409 = vmatpush.msra.mxu0 0.0
  %410 = vmatpush.msra.mxu0 0.0
  %411 = vmatpush.msra.mxu0 0.0
  %412 = vmatpush.msra.mxu0 0.0
  %413 = vmatpush.msra.mxu0 0.0
  %414 = vmatpush.msra.mxu0 %v155
  %415 = vmatpush.msra.mxu0 %v153
  %416 = vmatpush.msra.mxu0 %v151
  %417 = vmatpush.msra.mxu0 %v149
  %418 = vmatpush.msra.mxu0 %v147
  %419 = vmatpush.msra.mxu0 %v145
  %420 = vmatpush.msra.mxu0 %v143
  %421 = vmatpush.msra.mxu0 %v141
  %422 = vmatmul.f32.gmra.mxu0 %v384
  %v423 = vpop.f32.mrf.mxu0
  %v424 = vadd.f32 0.0, %v423
  %425 = vdwg.mxu0
  %v428 = vrot.slane %v404, 4
  %v429 = vrot.slane %v424, 4
  %v432 = vadd.f32 %v380, %v428
  %v433 = vadd.f32 %v381, %v429
  %v434 = vxor.u32 %v432, 2147483648
  %v435 = vxor.u32 %v433, 2147483648
  %v436 = vmul.f32 %v434, 1.442695
  %v437 = vpow.pop %v436
  %v438 = vmul.f32 %v435, 1.442695
  %v439 = vpow.pop %v438
  %v440 = vadd.f32 %v437, 1.0
  %v441 = vadd.f32 %v439, 1.0
  %v442 = vrcp.pop %v440
  %v443 = vmul.f32 %v440, %v442
  %v444 = vsub.f32 1.0, %v443
  %v445 = vmul.f32 %v442, %v444
  %v446 = vadd.f32 %v442, %v445
  %vm447 = vweird.f32 %v440
  %vm448 = vweird.f32 %v442
  %vm449 = vmor %vm447, %vm448
  %v450 = vsel %vm449, %v442, %v446
  %v451 = vand.u32 2147483647, %v440
  %vm452 = vcmp.eq.f32.partialorder %v451, 8.507059e+37
  %v453 = vand.u32 %v440, 2147483648
  %v454 = vor.u32 1.1754944e-38, %v453
  %v455 = vsel %vm452, %v454, %v450
  %v456 = vmul.f32 1.0, %v455
  %v457 = vrcp.pop %v441
  %v458 = vmul.f32 %v441, %v457
  %v459 = vsub.f32 1.0, %v458
  %v460 = vmul.f32 %v457, %v459
  %v461 = vadd.f32 %v457, %v460
  %vm462 = vweird.f32 %v441
  %vm463 = vweird.f32 %v457
  %vm464 = vmor %vm462, %vm463
  %v465 = vsel %vm464, %v457, %v461
  %v466 = vand.u32 2147483647, %v441
  %vm467 = vcmp.eq.f32.partialorder %v466, 8.507059e+37
  %v468 = vand.u32 %v441, 2147483648
  %v469 = vor.u32 1.1754944e-38, %v468
  %v470 = vsel %vm467, %v469, %v465
  %v471 = vmul.f32 1.0, %v470
  %v472 = vtanh.pop %v433
  %v474 = vrot.slane %v369, 6
  %v476 = vmul.f32 %v456, %v474
  %478 = vrot.lane.b32.xlu0 %v472, 64
  %v479 = vpop.permute.xlu0 %478
  %v481 = vmul.f32 %v456, %v479
  %483 = vrot.lane.b32.xlu0 %v481, 64
  %v484 = vpop.permute.xlu0 %483
  %v486 = vadd.f32 %v476, %v484
  %v487 = vtanh.pop %v486
  %489 = vrot.lane.b32.xlu0 %v487, 64
  %v490 = vpop.permute.xlu0 %489
  %v492 = vmul.f32 %v471, %v490
  %vm493 = vcmask 259076
  %494 = vst.msk [vmem:[#allocation3] sm:$0x30] %vm493, %v492
  %vm495 = vcmask 521476
  %496 = vst.msk [vmem:[#allocation3 + $0x6] sm:$0x30] %vm495, %v492
  %v497 = vld [vmem:[#allocation2] sm:$0xc0]
  %v498 = vld [vmem:[#allocation2 + $0x8] sm:$0xc0]
  %v500 = vrot.slane %v492, 4
  %v501 = vsel %vm158, %v500, 0
  %503 = vmatpush.msra.mxu0 0.0
  %504 = vmatpush.msra.mxu0 0.0
  %505 = vmatpush.msra.mxu0 0.0
  %506 = vmatpush.msra.mxu0 0.0
  %507 = vmatpush.msra.mxu0 0.0
  %508 = vmatpush.msra.mxu0 0.0
  %509 = vmatpush.msra.mxu0 0.0
  %510 = vmatpush.msra.mxu0 0.0
  %511 = vmatpush.msra.mxu0 %v154
  %512 = vmatpush.msra.mxu0 %v152
  %513 = vmatpush.msra.mxu0 %v150
  %514 = vmatpush.msra.mxu0 %v148
  %515 = vmatpush.msra.mxu0 %v146
  %516 = vmatpush.msra.mxu0 %v144
  %517 = vmatpush.msra.mxu0 %v142
  %518 = vmatpush.msra.mxu0 %v140
  %519 = vmatmul.f32.gmra.mxu0 %v501
  %v520 = vpop.f32.mrf.mxu0
  %v521 = vadd.f32 0.0, %v520
  %522 = vdwg.mxu0
  %523 = vmatpush.msra.mxu0 0.0
  %524 = vmatpush.msra.mxu0 0.0
  %525 = vmatpush.msra.mxu0 0.0
  %526 = vmatpush.msra.mxu0 0.0
  %527 = vmatpush.msra.mxu0 0.0
  %528 = vmatpush.msra.mxu0 0.0
  %529 = vmatpush.msra.mxu0 0.0
  %530 = vmatpush.msra.mxu0 0.0
  %531 = vmatpush.msra.mxu0 %v155
  %532 = vmatpush.msra.mxu0 %v153
  %533 = vmatpush.msra.mxu0 %v151
  %534 = vmatpush.msra.mxu0 %v149
  %535 = vmatpush.msra.mxu0 %v147
  %536 = vmatpush.msra.mxu0 %v145
  %537 = vmatpush.msra.mxu0 %v143
  %538 = vmatpush.msra.mxu0 %v141
  %539 = vmatmul.f32.gmra.mxu0 %v501
  %v540 = vpop.f32.mrf.mxu0
  %v541 = vadd.f32 0.0, %v540
  %542 = vdwg.mxu0
  %v545 = vrot.slane %v521, 2
  %v546 = vrot.slane %v541, 2
  %v549 = vadd.f32 %v497, %v545
  %v550 = vadd.f32 %v498, %v546
  %v551 = vxor.u32 %v549, 2147483648
  %v552 = vxor.u32 %v550, 2147483648
  %v553 = vmul.f32 %v551, 1.442695
  %v554 = vpow.pop %v553
  %v555 = vmul.f32 %v552, 1.442695
  %v556 = vpow.pop %v555
  %v557 = vadd.f32 %v554, 1.0
  %v558 = vadd.f32 %v556, 1.0
  %v559 = vrcp.pop %v557
  %v560 = vmul.f32 %v557, %v559
  %v561 = vsub.f32 1.0, %v560
  %v562 = vmul.f32 %v559, %v561
  %v563 = vadd.f32 %v559, %v562
  %vm564 = vweird.f32 %v557
  %vm565 = vweird.f32 %v559
  %vm566 = vmor %vm564, %vm565
  %v567 = vsel %vm566, %v559, %v563
  %v568 = vand.u32 2147483647, %v557
  %vm569 = vcmp.eq.f32.partialorder %v568, 8.507059e+37
  %v570 = vand.u32 %v557, 2147483648
  %v571 = vor.u32 1.1754944e-38, %v570
  %v572 = vsel %vm569, %v571, %v567
  %v573 = vmul.f32 1.0, %v572
  %v574 = vrcp.pop %v558
  %v575 = vmul.f32 %v558, %v574
  %v576 = vsub.f32 1.0, %v575
  %v577 = vmul.f32 %v574, %v576
  %v578 = vadd.f32 %v574, %v577
  %vm579 = vweird.f32 %v558
  %vm580 = vweird.f32 %v574
  %vm581 = vmor %vm579, %vm580
  %v582 = vsel %vm581, %v574, %v578
  %v583 = vand.u32 2147483647, %v558
  %vm584 = vcmp.eq.f32.partialorder %v583, 8.507059e+37
  %v585 = vand.u32 %v558, 2147483648
  %v586 = vor.u32 1.1754944e-38, %v585
  %v587 = vsel %vm584, %v586, %v582
  %v588 = vmul.f32 1.0, %v587
  %v589 = vtanh.pop %v550
  %v591 = vrot.slane %v486, 6
  %v593 = vmul.f32 %v573, %v591
  %595 = vrot.lane.b32.xlu0 %v589, 64
  %v596 = vpop.permute.xlu0 %595
  %v598 = vmul.f32 %v573, %v596
  %600 = vrot.lane.b32.xlu0 %v598, 64
  %v601 = vpop.permute.xlu0 %600
  %v603 = vadd.f32 %v593, %v601
  %v604 = vtanh.pop %v603
  %606 = vrot.lane.b32.xlu0 %v604, 64
  %v607 = vpop.permute.xlu0 %606
  %v609 = vmul.f32 %v588, %v607
  %vm610 = vcmask 261126
  %611 = vst.msk [vmem:[#allocation3] sm:$0xc0] %vm610, %v609
  %vm612 = vcmask 523526
  %613 = vst.msk [vmem:[#allocation3 + $0x2] sm:$0xc0] %vm612, %v609
  %v614 = vld [vmem:[#allocation2 + $0x10] sm:$0x3]
  %v615 = vld [vmem:[#allocation2 + $0x18] sm:$0x3]
  %v617 = vrot.slane %v609, 6
  %v618 = vsel %vm158, %v617, 0
  %620 = vmatpush.msra.mxu0 0.0
  %621 = vmatpush.msra.mxu0 0.0
  %622 = vmatpush.msra.mxu0 0.0
  %623 = vmatpush.msra.mxu0 0.0
  %624 = vmatpush.msra.mxu0 0.0
  %625 = vmatpush.msra.mxu0 0.0
  %626 = vmatpush.msra.mxu0 0.0
  %627 = vmatpush.msra.mxu0 0.0
  %628 = vmatpush.msra.mxu0 %v154
  %629 = vmatpush.msra.mxu0 %v152
  %630 = vmatpush.msra.mxu0 %v150
  %631 = vmatpush.msra.mxu0 %v148
  %632 = vmatpush.msra.mxu0 %v146
  %633 = vmatpush.msra.mxu0 %v144
  %634 = vmatpush.msra.mxu0 %v142
  %635 = vmatpush.msra.mxu0 %v140
  %636 = vmatmul.f32.gmra.mxu0 %v618
  %v637 = vpop.f32.mrf.mxu0
  %v638 = vadd.f32 0.0, %v637
  %639 = vdwg.mxu0
  %640 = vmatpush.msra.mxu0 0.0
  %641 = vmatpush.msra.mxu0 0.0
  %642 = vmatpush.msra.mxu0 0.0
  %643 = vmatpush.msra.mxu0 0.0
  %644 = vmatpush.msra.mxu0 0.0
  %645 = vmatpush.msra.mxu0 0.0
  %646 = vmatpush.msra.mxu0 0.0
  %647 = vmatpush.msra.mxu0 0.0
  %648 = vmatpush.msra.mxu0 %v155
  %649 = vmatpush.msra.mxu0 %v153
  %650 = vmatpush.msra.mxu0 %v151
  %651 = vmatpush.msra.mxu0 %v149
  %652 = vmatpush.msra.mxu0 %v147
  %653 = vmatpush.msra.mxu0 %v145
  %654 = vmatpush.msra.mxu0 %v143
  %655 = vmatpush.msra.mxu0 %v141
  %656 = vmatmul.f32.gmra.mxu0 %v618
  %v657 = vpop.f32.mrf.mxu0
  %v658 = vadd.f32 0.0, %v657
  %659 = vdwg.mxu0
  %v660 = vadd.f32 %v614, %v638
  %v661 = vadd.f32 %v615, %v658
  %v662 = vxor.u32 %v660, 2147483648
  %v663 = vxor.u32 %v661, 2147483648
  %v664 = vmul.f32 %v662, 1.442695
  %v665 = vpow.pop %v664
  %v666 = vmul.f32 %v663, 1.442695
  %v667 = vpow.pop %v666
  %v668 = vadd.f32 %v665, 1.0
  %v669 = vadd.f32 %v667, 1.0
  %v670 = vrcp.pop %v668
  %v671 = vmul.f32 %v668, %v670
  %v672 = vsub.f32 1.0, %v671
  %v673 = vmul.f32 %v670, %v672
  %v674 = vadd.f32 %v670, %v673
  %vm675 = vweird.f32 %v668
  %vm676 = vweird.f32 %v670
  %vm677 = vmor %vm675, %vm676
  %v678 = vsel %vm677, %v670, %v674
  %v679 = vand.u32 2147483647, %v668
  %vm680 = vcmp.eq.f32.partialorder %v679, 8.507059e+37
  %v681 = vand.u32 %v668, 2147483648
  %v682 = vor.u32 1.1754944e-38, %v681
  %v683 = vsel %vm680, %v682, %v678
  %v684 = vmul.f32 1.0, %v683
  %v685 = vrcp.pop %v669
  %v686 = vmul.f32 %v669, %v685
  %v687 = vsub.f32 1.0, %v686
  %v688 = vmul.f32 %v685, %v687
  %v689 = vadd.f32 %v685, %v688
  %vm690 = vweird.f32 %v669
  %vm691 = vweird.f32 %v685
  %vm692 = vmor %vm690, %vm691
  %v693 = vsel %vm692, %v685, %v689
  %v694 = vand.u32 2147483647, %v669
  %vm695 = vcmp.eq.f32.partialorder %v694, 8.507059e+37
  %v696 = vand.u32 %v669, 2147483648
  %v697 = vor.u32 1.1754944e-38, %v696
  %v698 = vsel %vm695, %v697, %v693
  %v699 = vmul.f32 1.0, %v698
  %v700 = vtanh.pop %v661
  %v702 = vrot.slane %v603, 6
  %v704 = vmul.f32 %v684, %v702
  %706 = vrot.lane.b32.xlu0 %v700, 64
  %v707 = vpop.permute.xlu0 %706
  %v709 = vmul.f32 %v684, %v707
  %711 = vrot.lane.b32.xlu0 %v709, 64
  %v712 = vpop.permute.xlu0 %711
  %v714 = vadd.f32 %v704, %v712
  %v715 = vtanh.pop %v714
  %717 = vrot.lane.b32.xlu0 %v715, 64
  %v718 = vpop.permute.xlu0 %717
  %v720 = vmul.f32 %v699, %v718
  %721 = vst.msk [vmem:[#allocation3 + $0x8] sm:$0x3] %vm260, %v720
  %722 = vst.msk [vmem:[#allocation3 + $0x6] sm:$0x3] %vm262, %v720
  %v723 = vld [vmem:[#allocation2 + $0x10] sm:$0xc]
  %v724 = vld [vmem:[#allocation2 + $0x18] sm:$0xc]
  %v726 = vsel %vm158, %v720, 0
  %728 = vmatpush.msra.mxu0 0.0
  %729 = vmatpush.msra.mxu0 0.0
  %730 = vmatpush.msra.mxu0 0.0
  %731 = vmatpush.msra.mxu0 0.0
  %732 = vmatpush.msra.mxu0 0.0
  %733 = vmatpush.msra.mxu0 0.0
  %734 = vmatpush.msra.mxu0 0.0
  %735 = vmatpush.msra.mxu0 0.0
  %736 = vmatpush.msra.mxu0 %v154
  %737 = vmatpush.msra.mxu0 %v152
  %738 = vmatpush.msra.mxu0 %v150
  %739 = vmatpush.msra.mxu0 %v148
  %740 = vmatpush.msra.mxu0 %v146
  %741 = vmatpush.msra.mxu0 %v144
  %742 = vmatpush.msra.mxu0 %v142
  %743 = vmatpush.msra.mxu0 %v140
  %744 = vmatmul.f32.gmra.mxu0 %v726
  %v745 = vpop.f32.mrf.mxu0
  %v746 = vadd.f32 0.0, %v745
  %747 = vdwg.mxu0
  %748 = vmatpush.msra.mxu0 0.0
  %749 = vmatpush.msra.mxu0 0.0
  %750 = vmatpush.msra.mxu0 0.0
  %751 = vmatpush.msra.mxu0 0.0
  %752 = vmatpush.msra.mxu0 0.0
  %753 = vmatpush.msra.mxu0 0.0
  %754 = vmatpush.msra.mxu0 0.0
  %755 = vmatpush.msra.mxu0 0.0
  %756 = vmatpush.msra.mxu0 %v155
  %757 = vmatpush.msra.mxu0 %v153
  %758 = vmatpush.msra.mxu0 %v151
  %759 = vmatpush.msra.mxu0 %v149
  %760 = vmatpush.msra.mxu0 %v147
  %761 = vmatpush.msra.mxu0 %v145
  %762 = vmatpush.msra.mxu0 %v143
  %763 = vmatpush.msra.mxu0 %v141
  %764 = vmatmul.f32.gmra.mxu0 %v726
  %v765 = vpop.f32.mrf.mxu0
  %v766 = vadd.f32 0.0, %v765
  %767 = vdwg.mxu0
  %v770 = vrot.slane %v746, 6
  %v771 = vrot.slane %v766, 6
  %v774 = vadd.f32 %v723, %v770
  %v775 = vadd.f32 %v724, %v771
  %v776 = vxor.u32 %v774, 2147483648
  %v777 = vxor.u32 %v775, 2147483648
  %v778 = vmul.f32 %v776, 1.442695
  %v779 = vpow.pop %v778
  %v780 = vmul.f32 %v777, 1.442695
  %v781 = vpow.pop %v780
  %v782 = vadd.f32 %v779, 1.0
  %v783 = vadd.f32 %v781, 1.0
  %v784 = vrcp.pop %v782
  %v785 = vmul.f32 %v782, %v784
  %v786 = vsub.f32 1.0, %v785
  %v787 = vmul.f32 %v784, %v786
  %v788 = vadd.f32 %v784, %v787
  %vm789 = vweird.f32 %v782
  %vm790 = vweird.f32 %v784
  %vm791 = vmor %vm789, %vm790
  %v792 = vsel %vm791, %v784, %v788
  %v793 = vand.u32 2147483647, %v782
  %vm794 = vcmp.eq.f32.partialorder %v793, 8.507059e+37
  %v795 = vand.u32 %v782, 2147483648
  %v796 = vor.u32 1.1754944e-38, %v795
  %v797 = vsel %vm794, %v796, %v792
  %v798 = vmul.f32 1.0, %v797
  %v799 = vrcp.pop %v783
  %v800 = vmul.f32 %v783, %v799
  %v801 = vsub.f32 1.0, %v800
  %v802 = vmul.f32 %v799, %v801
  %v803 = vadd.f32 %v799, %v802
  %vm804 = vweird.f32 %v783
  %vm805 = vweird.f32 %v799
  %vm806 = vmor %vm804, %vm805
  %v807 = vsel %vm806, %v799, %v803
  %v808 = vand.u32 2147483647, %v783
  %vm809 = vcmp.eq.f32.partialorder %v808, 8.507059e+37
  %v810 = vand.u32 %v783, 2147483648
  %v811 = vor.u32 1.1754944e-38, %v810
  %v812 = vsel %vm809, %v811, %v807
  %v813 = vmul.f32 1.0, %v812
  %v814 = vtanh.pop %v775
  %v816 = vrot.slane %v714, 6
  %v818 = vmul.f32 %v798, %v816
  %820 = vrot.lane.b32.xlu0 %v814, 64
  %v821 = vpop.permute.xlu0 %820
  %v823 = vmul.f32 %v798, %v821
  %825 = vrot.lane.b32.xlu0 %v823, 64
  %v826 = vpop.permute.xlu0 %825
  %v828 = vadd.f32 %v818, %v826
  %v829 = vtanh.pop %v828
  %831 = vrot.lane.b32.xlu0 %v829, 64
  %v832 = vpop.permute.xlu0 %831
  %v834 = vmul.f32 %v813, %v832
  %835 = vst.msk [vmem:[#allocation3 + $0x8] sm:$0xc] %vm376, %v834
  %836 = vst.msk [vmem:[#allocation3 + $0x2] sm:$0xc] %vm378, %v834
  %v837 = vld [vmem:[#allocation2 + $0x10] sm:$0x30]
  %v838 = vld [vmem:[#allocation2 + $0x18] sm:$0x30]
  %v840 = vrot.slane %v834, 2
  %v841 = vsel %vm158, %v840, 0
  %843 = vmatpush.msra.mxu0 0.0
  %844 = vmatpush.msra.mxu0 0.0
  %845 = vmatpush.msra.mxu0 0.0
  %846 = vmatpush.msra.mxu0 0.0
  %847 = vmatpush.msra.mxu0 0.0
  %848 = vmatpush.msra.mxu0 0.0
  %849 = vmatpush.msra.mxu0 0.0
  %850 = vmatpush.msra.mxu0 0.0
  %851 = vmatpush.msra.mxu0 %v154
  %852 = vmatpush.msra.mxu0 %v152
  %853 = vmatpush.msra.mxu0 %v150
  %854 = vmatpush.msra.mxu0 %v148
  %855 = vmatpush.msra.mxu0 %v146
  %856 = vmatpush.msra.mxu0 %v144
  %857 = vmatpush.msra.mxu0 %v142
  %858 = vmatpush.msra.mxu0 %v140
  %859 = vmatmul.f32.gmra.mxu0 %v841
  %v860 = vpop.f32.mrf.mxu0
  %v861 = vadd.f32 0.0, %v860
  %862 = vdwg.mxu0
  %863 = vmatpush.msra.mxu0 0.0
  %864 = vmatpush.msra.mxu0 0.0
  %865 = vmatpush.msra.mxu0 0.0
  %866 = vmatpush.msra.mxu0 0.0
  %867 = vmatpush.msra.mxu0 0.0
  %868 = vmatpush.msra.mxu0 0.0
  %869 = vmatpush.msra.mxu0 0.0
  %870 = vmatpush.msra.mxu0 0.0
  %871 = vmatpush.msra.mxu0 %v155
  %872 = vmatpush.msra.mxu0 %v153
  %873 = vmatpush.msra.mxu0 %v151
  %874 = vmatpush.msra.mxu0 %v149
  %875 = vmatpush.msra.mxu0 %v147
  %876 = vmatpush.msra.mxu0 %v145
  %877 = vmatpush.msra.mxu0 %v143
  %878 = vmatpush.msra.mxu0 %v141
  %879 = vmatmul.f32.gmra.mxu0 %v841
  %v880 = vpop.f32.mrf.mxu0
  %v881 = vadd.f32 0.0, %v880
  %882 = vdwg.mxu0
  %v885 = vrot.slane %v861, 4
  %v886 = vrot.slane %v881, 4
  %v889 = vadd.f32 %v837, %v885
  %v890 = vadd.f32 %v838, %v886
  %v891 = vxor.u32 %v889, 2147483648
  %v892 = vxor.u32 %v890, 2147483648
  %v893 = vmul.f32 %v891, 1.442695
  %v894 = vpow.pop %v893
  %v895 = vmul.f32 %v892, 1.442695
  %v896 = vpow.pop %v895
  %v897 = vadd.f32 %v894, 1.0
  %v898 = vadd.f32 %v896, 1.0
  %v899 = vrcp.pop %v897
  %v900 = vmul.f32 %v897, %v899
  %v901 = vsub.f32 1.0, %v900
  %v902 = vmul.f32 %v899, %v901
  %v903 = vadd.f32 %v899, %v902
  %vm904 = vweird.f32 %v897
  %vm905 = vweird.f32 %v899
  %vm906 = vmor %vm904, %vm905
  %v907 = vsel %vm906, %v899, %v903
  %v908 = vand.u32 2147483647, %v897
  %vm909 = vcmp.eq.f32.partialorder %v908, 8.507059e+37
  %v910 = vand.u32 %v897, 2147483648
  %v911 = vor.u32 1.1754944e-38, %v910
  %v912 = vsel %vm909, %v911, %v907
  %v913 = vmul.f32 1.0, %v912
  %v914 = vrcp.pop %v898
  %v915 = vmul.f32 %v898, %v914
  %v916 = vsub.f32 1.0, %v915
  %v917 = vmul.f32 %v914, %v916
  %v918 = vadd.f32 %v914, %v917
  %vm919 = vweird.f32 %v898
  %vm920 = vweird.f32 %v914
  %vm921 = vmor %vm919, %vm920
  %v922 = vsel %vm921, %v914, %v918
  %v923 = vand.u32 2147483647, %v898
  %vm924 = vcmp.eq.f32.partialorder %v923, 8.507059e+37
  %v925 = vand.u32 %v898, 2147483648
  %v926 = vor.u32 1.1754944e-38, %v925
  %v927 = vsel %vm924, %v926, %v922
  %v928 = vmul.f32 1.0, %v927
  %v929 = vtanh.pop %v890
  %v931 = vrot.slane %v828, 6
  %v933 = vmul.f32 %v913, %v931
  %935 = vrot.lane.b32.xlu0 %v929, 64
  %v936 = vpop.permute.xlu0 %935
  %v938 = vmul.f32 %v913, %v936
  %940 = vrot.lane.b32.xlu0 %v938, 64
  %v941 = vpop.permute.xlu0 %940
  %v943 = vadd.f32 %v933, %v941
  %v944 = vtanh.pop %v943
  %946 = vrot.lane.b32.xlu0 %v944, 64
  %v947 = vpop.permute.xlu0 %946
  %v949 = vmul.f32 %v928, %v947
  %950 = vst.msk [vmem:[#allocation3 + $0x8] sm:$0x30] %vm493, %v949
  %951 = vst.msk [vmem:[#allocation3 - $0x2] sm:$0x30] %vm495, %v949
  %v952 = vld [vmem:[#allocation2 + $0x10] sm:$0xc0]
  %v953 = vld [vmem:[#allocation2 + $0x18] sm:$0xc0]
  %v955 = vrot.slane %v949, 4
  %v956 = vsel %vm158, %v955, 0
  %958 = vmatpush.msra.mxu0 0.0
  %959 = vmatpush.msra.mxu0 0.0
  %960 = vmatpush.msra.mxu0 0.0
  %961 = vmatpush.msra.mxu0 0.0
  %962 = vmatpush.msra.mxu0 0.0
  %963 = vmatpush.msra.mxu0 0.0
  %964 = vmatpush.msra.mxu0 0.0
  %965 = vmatpush.msra.mxu0 0.0
  %966 = vmatpush.msra.mxu0 %v154
  %967 = vmatpush.msra.mxu0 %v152
  %968 = vmatpush.msra.mxu0 %v150
  %969 = vmatpush.msra.mxu0 %v148
  %970 = vmatpush.msra.mxu0 %v146
  %971 = vmatpush.msra.mxu0 %v144
  %972 = vmatpush.msra.mxu0 %v142
  %973 = vmatpush.msra.mxu0 %v140
  %974 = vmatmul.f32.gmra.mxu0 %v956
  %v975 = vpop.f32.mrf.mxu0
  %v976 = vadd.f32 0.0, %v975
  %977 = vdwg.mxu0
  %978 = vmatpush.msra.mxu0 0.0
  %979 = vmatpush.msra.mxu0 0.0
  %980 = vmatpush.msra.mxu0 0.0
  %981 = vmatpush.msra.mxu0 0.0
  %982 = vmatpush.msra.mxu0 0.0
  %983 = vmatpush.msra.mxu0 0.0
  %984 = vmatpush.msra.mxu0 0.0
  %985 = vmatpush.msra.mxu0 0.0
  %986 = vmatpush.msra.mxu0 %v155
  %987 = vmatpush.msra.mxu0 %v153
  %988 = vmatpush.msra.mxu0 %v151
  %989 = vmatpush.msra.mxu0 %v149
  %990 = vmatpush.msra.mxu0 %v147
  %991 = vmatpush.msra.mxu0 %v145
  %992 = vmatpush.msra.mxu0 %v143
  %993 = vmatpush.msra.mxu0 %v141
  %994 = vmatmul.f32.gmra.mxu0 %v956
  %v995 = vpop.f32.mrf.mxu0
  %v996 = vadd.f32 0.0, %v995
  %997 = vdwg.mxu0
  %v1000 = vrot.slane %v976, 2
  %v1001 = vrot.slane %v996, 2
  %v1004 = vadd.f32 %v952, %v1000
  %v1005 = vadd.f32 %v953, %v1001
  %v1006 = vxor.u32 %v1004, 2147483648
  %v1007 = vxor.u32 %v1005, 2147483648
  %v1008 = vmul.f32 %v1006, 1.442695
  %v1009 = vpow.pop %v1008
  %v1010 = vmul.f32 %v1007, 1.442695
  %v1011 = vpow.pop %v1010
  %v1012 = vadd.f32 %v1009, 1.0
  %v1013 = vadd.f32 %v1011, 1.0
  %v1014 = vrcp.pop %v1012
  %v1015 = vmul.f32 %v1012, %v1014
  %v1016 = vsub.f32 1.0, %v1015
  %v1017 = vmul.f32 %v1014, %v1016
  %v1018 = vadd.f32 %v1014, %v1017
  %vm1019 = vweird.f32 %v1012
  %vm1020 = vweird.f32 %v1014
  %vm1021 = vmor %vm1019, %vm1020
  %v1022 = vsel %vm1021, %v1014, %v1018
  %v1023 = vand.u32 2147483647, %v1012
  %vm1024 = vcmp.eq.f32.partialorder %v1023, 8.507059e+37
  %v1025 = vand.u32 %v1012, 2147483648
  %v1026 = vor.u32 1.1754944e-38, %v1025
  %v1027 = vsel %vm1024, %v1026, %v1022
  %v1028 = vmul.f32 1.0, %v1027
  %v1029 = vrcp.pop %v1013
  %v1030 = vmul.f32 %v1013, %v1029
  %v1031 = vsub.f32 1.0, %v1030
  %v1032 = vmul.f32 %v1029, %v1031
  %v1033 = vadd.f32 %v1029, %v1032
  %vm1034 = vweird.f32 %v1013
  %vm1035 = vweird.f32 %v1029
  %vm1036 = vmor %vm1034, %vm1035
  %v1037 = vsel %vm1036, %v1029, %v1033
  %v1038 = vand.u32 2147483647, %v1013
  %vm1039 = vcmp.eq.f32.partialorder %v1038, 8.507059e+37
  %v1040 = vand.u32 %v1013, 2147483648
  %v1041 = vor.u32 1.1754944e-38, %v1040
  %v1042 = vsel %vm1039, %v1041, %v1037
  %v1043 = vmul.f32 1.0, %v1042
  %v1044 = vtanh.pop %v1005
  %v1046 = vrot.slane %v943, 6
  %v1048 = vmul.f32 %v1028, %v1046
  %1050 = vrot.lane.b32.xlu0 %v1044, 64
  %v1051 = vpop.permute.xlu0 %1050
  %v1053 = vmul.f32 %v1028, %v1051
  %1055 = vrot.lane.b32.xlu0 %v1053, 64
  %v1056 = vpop.permute.xlu0 %1055
  %v1058 = vadd.f32 %v1048, %v1056
  %v1059 = vtanh.pop %v1058
  %1061 = vrot.lane.b32.xlu0 %v1059, 64
  %v1062 = vpop.permute.xlu0 %1061
  %v1064 = vmul.f32 %v1043, %v1062
  %1065 = vst.msk [vmem:[#allocation3 + $0x8] sm:$0xc0] %vm610, %v1064
  %1066 = vst.msk [vmem:[#allocation3 - $0x6] sm:$0xc0] %vm612, %v1064
  %v1067 = vld [vmem:[#allocation3] sm:$0xff]
  %v1068 = vld [vmem:[#allocation3 + $0x8] sm:$0xff]
  %v1069 = vld [vmem:[%s1] sm:$0xff]
  %v1070 = vld [vmem:[%s1 + $0x8] sm:$0xff]
  %1072 = vset.pattern.permute.xlu0 0
  %1073 = vperm.xlu0 %1072, %v1069
  %v1074 = vpop.permute.xlu0 %1073
  %1077 = vset.pattern.permute.xlu0 0
  %1078 = vperm.xlu0 %1077, %v1070
  %v1079 = vpop.permute.xlu0 %1078
  %v1081 = vmul.f32 %v1067, %v1074
  %v1082 = vmul.f32 %v1068, %v1079
  %v1083 = vld [vmem:[%s5] sm:$0xff]
  %v1084 = vld [vmem:[%s5 + $0x8] sm:$0xff]
  %v1085 = vld [vmem:[%s5 + $0x10] sm:$0xff]
  %v1086 = vld [vmem:[%s5 + $0x18] sm:$0xff]
  %v1087 = vld [vmem:[%s5 + $0x20] sm:$0xff]
  %v1088 = vld [vmem:[%s5 + $0x28] sm:$0xff]
  %v1089 = vld [vmem:[%s5 + $0x30] sm:$0xff]
  %v1090 = vld [vmem:[%s5 + $0x38] sm:$0xff]
  %v1091 = vld [vmem:[%s6] sm:$0x1]
  %v1093 = vperm.slane %v1091, 0
  %v1096 = vsel %vm158, %v1081, 0
  %v1099 = vsel %vm158, %v1082, 0
  %1101 = vmatpush.msra.mxu0 0.0
  %1102 = vmatpush.msra.mxu0 0.0
  %1103 = vmatpush.msra.mxu0 0.0
  %1104 = vmatpush.msra.mxu0 0.0
  %1105 = vmatpush.msra.mxu0 0.0
  %1106 = vmatpush.msra.mxu0 0.0
  %1107 = vmatpush.msra.mxu0 0.0
  %1108 = vmatpush.msra.mxu0 0.0
  %1109 = vmatpush.msra.mxu0 %v1090
  %1110 = vmatpush.msra.mxu0 %v1089
  %1111 = vmatpush.msra.mxu0 %v1088
  %1112 = vmatpush.msra.mxu0 %v1087
  %1113 = vmatpush.msra.mxu0 %v1086
  %1114 = vmatpush.msra.mxu0 %v1085
  %1115 = vmatpush.msra.mxu0 %v1084
  %1116 = vmatpush.msra.mxu0 %v1083
  %1117 = vmatmul.f32.gmra.mxu0 %v1096
  %v1118 = vpop.f32.mrf.mxu0
  %v1119 = vadd.f32 %v1093, %v1118
  %1120 = vmatmul.f32.gmra.mxu0 %v1099
  %v1121 = vpop.f32.mrf.mxu0
  %v1122 = vadd.f32 %v1093, %v1121
  %1123 = vdwg.mxu0
  %v1124 = vmax.f32 %v1119, 0.0
  %v1125 = vmax.f32 %v1122, 0.0
  %v1126 = vld [vmem:[%s7] sm:$0x1]
  %v1127 = vld [vmem:[%s8] sm:$0x1]
  %1128 = vadd.xlane.f32.xlu0 %v1124
  %v1129 = vpop.xlane.xlu0 %1128
  %1130 = vadd.xlane.f32.xlu0 %v1125
  %v1131 = vpop.xlane.xlu0 %1130
  %v1132 = vrcp.pop 128.0
  %v1133 = vmul.f32 128.0, %v1132
  %v1134 = vsub.f32 1.0, %v1133
  %v1135 = vmul.f32 %v1132, %v1134
  %v1136 = vadd.f32 %v1132, %v1135
  %vm1137 = vweird.f32 %v1132
  %v1138 = vsel %vm1137, %v1132, %v1136
  %v1139 = vmul.f32 %v1129, %v1138
  %v1140 = vmul.f32 %v1131, %v1138
  %v1141 = vsub.f32 %v1124, %v1139
  %v1142 = vsub.f32 %v1125, %v1140
  %v1143 = vmul.f32 %v1141, %v1141
  %v1144 = vmul.f32 %v1142, %v1142
  %1145 = vadd.xlane.f32.xlu0 %v1143
  %v1146 = vpop.xlane.xlu0 %1145
  %1147 = vadd.xlane.f32.xlu0 %v1144
  %v1148 = vpop.xlane.xlu0 %1147
  %v1149 = vmul.f32 %v1146, %v1138
  %v1150 = vmul.f32 %v1148, %v1138
  %v1151 = vadd.f32 %v1149, 1e-05
  %v1152 = vadd.f32 %v1150, 1e-05
  %v1153 = vrsqrt.pop %v1151
  %v1154 = vmul.f32 %v1153, %v1151
  %v1155 = vmul.f32 %v1154, %v1153
  %v1156 = vmul.f32 0.5, %v1155
  %v1157 = vsub.f32 1.5, %v1156
  %v1158 = vmul.f32 %v1153, %v1157
  %vm1159 = vweird.f32 %v1151
  %vm1160 = vweird.f32 %v1153
  %vm1161 = vmor %vm1159, %vm1160
  %v1162 = vsel %vm1161, %v1153, %v1158
  %v1163 = vrsqrt.pop %v1152
  %v1164 = vmul.f32 %v1163, %v1152
  %v1165 = vmul.f32 %v1164, %v1163
  %v1166 = vmul.f32 0.5, %v1165
  %v1167 = vsub.f32 1.5, %v1166
  %v1168 = vmul.f32 %v1163, %v1167
  %vm1169 = vweird.f32 %v1152
  %vm1170 = vweird.f32 %v1163
  %vm1171 = vmor %vm1169, %vm1170
  %v1172 = vsel %vm1171, %v1163, %v1168
  %v1173 = vmul.f32 %v1141, %v1162
  %v1174 = vmul.f32 %v1142, %v1172
  %v1176 = vperm.slane %v1126, 0
  %v1178 = vmul.f32 %v1173, %v1176
  %v1179 = vmul.f32 %v1174, %v1176
  %v1181 = vperm.slane %v1127, 0
  %v1183 = vadd.f32 %v1178, %v1181
  %v1184 = vadd.f32 %v1179, %v1181
  %v1185 = vld [vmem:[%s9] sm:$0xff]
  %v1186 = vld [vmem:[%s9 + $0x8] sm:$0xff]
  %v1187 = vld [vmem:[%s9 + $0x10] sm:$0xff]
  %v1188 = vld [vmem:[%s9 + $0x18] sm:$0xff]
  %v1189 = vld [vmem:[%s9 + $0x20] sm:$0xff]
  %v1190 = vld [vmem:[%s9 + $0x28] sm:$0xff]
  %v1191 = vld [vmem:[%s9 + $0x30] sm:$0xff]
  %v1192 = vld [vmem:[%s9 + $0x38] sm:$0xff]
  %v1193 = vld [vmem:[%s9 + $0x40] sm:$0xff]
  %v1194 = vld [vmem:[%s9 + $0x48] sm:$0xff]
  %v1195 = vld [vmem:[%s9 + $0x50] sm:$0xff]
  %v1196 = vld [vmem:[%s9 + $0x58] sm:$0xff]
  %v1197 = vld [vmem:[%s9 + $0x60] sm:$0xff]
  %v1198 = vld [vmem:[%s9 + $0x68] sm:$0xff]
  %v1199 = vld [vmem:[%s9 + $0x70] sm:$0xff]
  %v1200 = vld [vmem:[%s9 + $0x78] sm:$0xff]
  %v1201 = vld [vmem:[%s10] sm:$0x1]
  %v1203 = vperm.slane %v1201, 0
  %1205 = vmatpush.msra.mxu0 %v1200
  %1206 = vmatpush.msra.mxu0 %v1199
  %1207 = vmatpush.msra.mxu0 %v1198
  %1208 = vmatpush.msra.mxu0 %v1197
  %1209 = vmatpush.msra.mxu0 %v1196
  %1210 = vmatpush.msra.mxu0 %v1195
  %1211 = vmatpush.msra.mxu0 %v1194
  %1212 = vmatpush.msra.mxu0 %v1193
  %1213 = vmatpush.msra.mxu0 %v1192
  %1214 = vmatpush.msra.mxu0 %v1191
  %1215 = vmatpush.msra.mxu0 %v1190
  %1216 = vmatpush.msra.mxu0 %v1189
  %1217 = vmatpush.msra.mxu0 %v1188
  %1218 = vmatpush.msra.mxu0 %v1187
  %1219 = vmatpush.msra.mxu0 %v1186
  %1220 = vmatpush.msra.mxu0 %v1185
  %1221 = vmatmul.f32.gmra.mxu0 %v1183
  %v1222 = vpop.f32.mrf.mxu0
  %v1223 = vadd.f32 %v1203, %v1222
  %1224 = vmatmul.f32.gmra.mxu0 %v1184
  %v1225 = vpop.f32.mrf.mxu0
  %v1226 = vadd.f32 %v1203, %v1225
  %1227 = vdwg.mxu0
  %v1228 = vmax.f32 %v1223, 0.0
  %v1229 = vmax.f32 %v1226, 0.0
  %v1230 = vld [vmem:[%s11] sm:$0x1]
  %v1231 = vld [vmem:[%s12] sm:$0x1]
  %1232 = vadd.xlane.f32.xlu0 %v1228
  %v1233 = vpop.xlane.xlu0 %1232
  %1234 = vadd.xlane.f32.xlu0 %v1229
  %v1235 = vpop.xlane.xlu0 %1234
  %v1236 = vmul.f32 %v1233, %v1138
  %v1237 = vmul.f32 %v1235, %v1138
  %v1238 = vsub.f32 %v1228, %v1236
  %v1239 = vsub.f32 %v1229, %v1237
  %v1240 = vmul.f32 %v1238, %v1238
  %v1241 = vmul.f32 %v1239, %v1239
  %1242 = vadd.xlane.f32.xlu0 %v1240
  %v1243 = vpop.xlane.xlu0 %1242
  %1244 = vadd.xlane.f32.xlu0 %v1241
  %v1245 = vpop.xlane.xlu0 %1244
  %v1246 = vmul.f32 %v1243, %v1138
  %v1247 = vmul.f32 %v1245, %v1138
  %v1248 = vadd.f32 %v1246, 1e-05
  %v1249 = vadd.f32 %v1247, 1e-05
  %v1250 = vrsqrt.pop %v1248
  %v1251 = vmul.f32 %v1250, %v1248
  %v1252 = vmul.f32 %v1251, %v1250
  %v1253 = vmul.f32 0.5, %v1252
  %v1254 = vsub.f32 1.5, %v1253
  %v1255 = vmul.f32 %v1250, %v1254
  %vm1256 = vweird.f32 %v1248
  %vm1257 = vweird.f32 %v1250
  %vm1258 = vmor %vm1256, %vm1257
  %v1259 = vsel %vm1258, %v1250, %v1255
  %v1260 = vrsqrt.pop %v1249
  %v1261 = vmul.f32 %v1260, %v1249
  %v1262 = vmul.f32 %v1261, %v1260
  %v1263 = vmul.f32 0.5, %v1262
  %v1264 = vsub.f32 1.5, %v1263
  %v1265 = vmul.f32 %v1260, %v1264
  %vm1266 = vweird.f32 %v1249
  %vm1267 = vweird.f32 %v1260
  %vm1268 = vmor %vm1266, %vm1267
  %v1269 = vsel %vm1268, %v1260, %v1265
  %v1270 = vmul.f32 %v1238, %v1259
  %v1271 = vmul.f32 %v1239, %v1269
  %v1273 = vperm.slane %v1230, 0
  %v1275 = vmul.f32 %v1270, %v1273
  %v1276 = vmul.f32 %v1271, %v1273
  %v1278 = vperm.slane %v1231, 0
  %v1280 = vadd.f32 %v1275, %v1278
  %v1281 = vadd.f32 %v1276, %v1278
  %v1282 = vld [vmem:[%s13] sm:$0xff]
  %v1283 = vld [vmem:[%s13 + $0x8] sm:$0xff]
  %v1284 = vld [vmem:[%s13 + $0x10] sm:$0xff]
  %v1285 = vld [vmem:[%s13 + $0x18] sm:$0xff]
  %v1286 = vld [vmem:[%s13 + $0x20] sm:$0xff]
  %v1287 = vld [vmem:[%s13 + $0x28] sm:$0xff]
  %v1288 = vld [vmem:[%s13 + $0x30] sm:$0xff]
  %v1289 = vld [vmem:[%s13 + $0x38] sm:$0xff]
  %v1290 = vld [vmem:[%s13 + $0x40] sm:$0xff]
  %v1291 = vld [vmem:[%s13 + $0x48] sm:$0xff]
  %v1292 = vld [vmem:[%s13 + $0x50] sm:$0xff]
  %v1293 = vld [vmem:[%s13 + $0x58] sm:$0xff]
  %v1294 = vld [vmem:[%s13 + $0x60] sm:$0xff]
  %v1295 = vld [vmem:[%s13 + $0x68] sm:$0xff]
  %v1296 = vld [vmem:[%s13 + $0x70] sm:$0xff]
  %v1297 = vld [vmem:[%s13 + $0x78] sm:$0xff]
  %v1298 = vld [vmem:[%s14] sm:$0x1]
  %v1300 = vperm.slane %v1298, 0
  %1302 = vmatpush.msra.mxu0 %v1297
  %1303 = vmatpush.msra.mxu0 %v1296
  %1304 = vmatpush.msra.mxu0 %v1295
  %1305 = vmatpush.msra.mxu0 %v1294
  %1306 = vmatpush.msra.mxu0 %v1293
  %1307 = vmatpush.msra.mxu0 %v1292
  %1308 = vmatpush.msra.mxu0 %v1291
  %1309 = vmatpush.msra.mxu0 %v1290
  %1310 = vmatpush.msra.mxu0 %v1289
  %1311 = vmatpush.msra.mxu0 %v1288
  %1312 = vmatpush.msra.mxu0 %v1287
  %1313 = vmatpush.msra.mxu0 %v1286
  %1314 = vmatpush.msra.mxu0 %v1285
  %1315 = vmatpush.msra.mxu0 %v1284
  %1316 = vmatpush.msra.mxu0 %v1283
  %1317 = vmatpush.msra.mxu0 %v1282
  %1318 = vmatmul.f32.gmra.mxu0 %v1280
  %v1319 = vpop.f32.mrf.mxu0
  %v1320 = vadd.f32 %v1300, %v1319
  %1321 = vmatmul.f32.gmra.mxu0 %v1281
  %v1322 = vpop.f32.mrf.mxu0
  %v1323 = vadd.f32 %v1300, %v1322
  %1324 = vdwg.mxu0
  %1325 = vst [vmem:[%s15] sm:$0xff] %v1320
  %1326 = vst [vmem:[%s15 + $0x8] sm:$0xff] %v1323
  // Predicated region
  $region62: #{clan_lstm_batch_forward.1} parent=0 // pred_check
    _
  $region63: #{clan_lstm_batch_forward.1} parent=0 // pred_check_branch
    %1328 = sbr.rel (0) target = $region65
  $region64: #{clan_lstm_batch_forward.1} parent=0 // pred_region
    _
  $region65: #{clan_lstm_batch_forward.1} parent=0 // pred_fallthru
    _
  // Predicated region
  $region66: #{clan_lstm_batch_forward.1} parent=0 // pred_check
    _
  $region67: #{clan_lstm_batch_forward.1} parent=0 // pred_check_branch
    %1330 = sbr.rel (0) target = $region69
  $region68: #{clan_lstm_batch_forward.1} parent=0 // pred_region
    _
  $region69: #{clan_lstm_batch_forward.1} parent=0 // pred_fallthru
    _

</llo_original>
